<compile_context>
chip_gen: v7x
topology: tpu7x:2x2x1
jax: 0.10.0
libtpu: 0.0.40
codegen_flags: <defaults>
</compile_context>

<pallas_src>
import functools

import jax
import jax.numpy as jnp
from jax.experimental import pallas as pl
from jax.experimental.pallas import tpu as pltpu


def _encoder_gru_kernel(ids_ref,    # SMEM (seq,)  int32 token ids (pre-clamped)
                        emb_hbm,    # ANY  (vocab, Hp) f32 embedding table (HBM)
                        w_ih_ref,   # VMEM (Hp, 3*Hp) bf16  gate-padded W_ih^T
                        w_hh_ref,   # VMEM (Hp, 3*Hp) bf16  gate-padded W_hh^T
                        b_ih_ref,   # VMEM (1, 3*Hp)  f32
                        b_hh_ref,   # VMEM (1, 3*Hp)  f32
                        h0_ref,     # VMEM (1, Hp)    f32
                        out_ref,    # VMEM (seq, Hp)  f32
                        hn_ref,     # VMEM (1, Hp)    f32
                        x_seq,      # VMEM scratch (seq, Hp) f32 (gathered rows)
                        dma_sems,   # DMA sems (ring,)
                        *, ring):
    seq_len = out_ref.shape[0]
    Hp = hn_ref.shape[-1]

    def row_copy(t, slot):
        return pltpu.make_async_copy(emb_hbm.at[pl.ds(ids_ref[t], 1), :],
                                     x_seq.at[pl.ds(t, 1), :],
                                     dma_sems.at[slot])

    def row_wait(t, slot):
        # Wait descriptor only needs matching shape/byte-count for the sem.
        pltpu.make_async_copy(emb_hbm.at[pl.ds(0, 1), :],
                              x_seq.at[pl.ds(t, 1), :],
                              dma_sems.at[slot]).wait()

    # ---- Phase 1: issue the embedding-row gathers (fixed sem ring). ----------
    for t in range(seq_len):
        slot = t % ring
        if t >= ring:                 # slot reuse: drain the older copy first
            row_wait(t - ring, slot)
        row_copy(t, slot).start()

    # ---- Phase 2: x-independent work, overlapped with the gather DMAs. -------
    w_ih = w_ih_ref[...]                                   # bf16 (Hp, 3Hp)
    w_hh = w_hh_ref[...]                                   # bf16 (Hp, 3Hp)
    b_ih = b_ih_ref[...]                                   # f32  (1, 3Hp)
    b_hh = b_hh_ref[...]                                   # f32  (1, 3Hp)
    h = h0_ref[...].astype(jnp.float32)                    # (1, Hp)
    gh = (jnp.dot(h.astype(w_hh.dtype), w_hh,
                  preferred_element_type=jnp.float32) + b_hh)   # step-0 gh

    # ---- Phase 3: drain the outstanding gathers. ------------------------------
    for t in range(max(0, seq_len - ring), seq_len):
        row_wait(t, t % ring)

    # ---- Phase 4: hoisted input projection (one batched MXU matmul). ---------
    gi_all = (jnp.dot(x_seq[...].astype(w_ih.dtype), w_ih,
                      preferred_element_type=jnp.float32) + b_ih)  # (seq, 3Hp)

    # ---- Phase 5: fully-unrolled recurrence; h stays in vregs. ---------------
    hs = []
    for t in range(seq_len):
        gi = gi_all[t:t + 1, :]                            # static slice (1, 3Hp)

        # Gate boundaries are 128-lane aligned -> whole-vreg slices.
        i_r, i_z, i_n = gi[:, 0:Hp], gi[:, Hp:2 * Hp], gi[:, 2 * Hp:3 * Hp]
        h_r, h_z, h_n = gh[:, 0:Hp], gh[:, Hp:2 * Hp], gh[:, 2 * Hp:3 * Hp]

        r = jax.nn.sigmoid(i_r + h_r)
        z = jax.nn.sigmoid(i_z + h_z)
        n = jnp.tanh(i_n + r * h_n)
        h = (1.0 - z) * n + z * h
        hs.append(h)

        if t + 1 < seq_len:                                # next step's gh
            gh = (jnp.dot(h.astype(w_hh.dtype), w_hh,
                          preferred_element_type=jnp.float32) + b_hh)

    out_ref[...] = jnp.concatenate(hs, axis=0).astype(out_ref.dtype)  # dense vst
    hn_ref[...] = h.astype(hn_ref.dtype)


def _pad_gate_weight(w_t, H, Hp):
    """(H, 3H) -> (Hp, 3*Hp); each HxH gate block placed at a 128-lane boundary."""
    out = jnp.zeros((Hp, 3 * Hp), w_t.dtype)
    for g in range(3):
        out = out.at[:H, g * Hp:g * Hp + H].set(w_t[:, g * H:(g + 1) * H])
    return out


def _pad_gate_bias(b, H, Hp):
    """(1, 3H) -> (1, 3*Hp) with the same 128-aligned gate layout."""
    out = jnp.zeros((1, 3 * Hp), b.dtype)
    for g in range(3):
        out = out.at[0, g * Hp:g * Hp + H].set(b[0, g * H:(g + 1) * H])
    return out


def prepare_params(params):
    """One-time parameter prep (padding + dtype cast) OUTSIDE the jitted forward."""
    emb = params["embedding"].astype(jnp.float32)
    vocab, H = emb.shape
    Hp = ((H + 127) // 128) * 128
    return {
        # Table kept f32 so single-row gather DMAs stay 32-bit sublane granular.
        "embedding": jnp.pad(emb, ((0, 0), (0, Hp - H))),
        "w_ih": _pad_gate_weight(params["w_ih_t"].astype(jnp.float32), H, Hp
                                 ).astype(jnp.bfloat16),
        "w_hh": _pad_gate_weight(params["w_hh_t"].astype(jnp.float32), H, Hp
                                 ).astype(jnp.bfloat16),
        "b_ih": _pad_gate_bias(params["b_ih"].astype(jnp.float32), H, Hp),
        "b_hh": _pad_gate_bias(params["b_hh"].astype(jnp.float32), H, Hp),
    }


@jax.jit
def encoder_rnn_forward(word_inputs, hidden, prepped):
    """Matches EncoderRNN.forward(word_inputs, hidden) for n_layers=1, batch=1.

    word_inputs: (seq_len,) int token ids
    hidden:      (n_layers=1, 1, H) float32
    prepped:     output of prepare_params()
    returns (output (seq_len, 1, H), hidden (1, 1, H))
    """
    emb_p = prepped["embedding"]
    vocab, Hp = emb_p.shape
    H = hidden.shape[-1]
    seq_len = word_inputs.shape[0]
    ring = min(seq_len, 8)

    # Clamp ids so an out-of-range token can't silently read adjacent memory.
    ids = jnp.clip(word_inputs.astype(jnp.int32), 0, vocab - 1)
    h0_p = jnp.pad(hidden.reshape(1, H).astype(jnp.float32),
                   ((0, 0), (0, Hp - H)))

    kernel = functools.partial(_encoder_gru_kernel, ring=ring)
    out_p, hn_p = pl.pallas_call(
        kernel,
        out_shape=(
            jax.ShapeDtypeStruct((seq_len, Hp), jnp.float32),
            jax.ShapeDtypeStruct((1, Hp), jnp.float32),
        ),
        in_specs=[
            pl.BlockSpec(memory_space=pltpu.MemorySpace.SMEM),   # ids
            pl.BlockSpec(memory_space=pl.ANY),                   # embedding (HBM)
            pl.BlockSpec(memory_space=pltpu.MemorySpace.VMEM),   # W_ih^T (padded)
            pl.BlockSpec(memory_space=pltpu.MemorySpace.VMEM),   # W_hh^T (padded)
            pl.BlockSpec(memory_space=pltpu.MemorySpace.VMEM),   # b_ih
            pl.BlockSpec(memory_space=pltpu.MemorySpace.VMEM),   # b_hh
            pl.BlockSpec(memory_space=pltpu.MemorySpace.VMEM),   # h0
        ],
        out_specs=(
            pl.BlockSpec(memory_space=pltpu.MemorySpace.VMEM),
            pl.BlockSpec(memory_space=pltpu.MemorySpace.VMEM),
        ),
        scratch_shapes=[
            pltpu.VMEM((seq_len, Hp), jnp.float32),   # gathered embedding rows
            pltpu.SemaphoreType.DMA((ring,)),         # fixed-size gather sem ring
        ],
    )(ids, emb_p, prepped["w_ih"], prepped["w_hh"],
      prepped["b_ih"], prepped["b_hh"], h0_p)

    output = out_p[:, :H].reshape(seq_len, 1, H)      # (seq, batch=1, H)
    hidden_out = hn_p[:, :H].reshape(1, 1, H)         # (n_layers=1, 1, H)
    return output, hidden_out


def _reference_forward(word_inputs, hidden, params, matmul_dtype=jnp.float32):
    """Pure-JAX reference of torch.nn.Embedding + torch.nn.GRU (batch=1).

    With matmul_dtype=bfloat16 it mirrors the kernel's mixed precision exactly
    (bf16 MXU operands, f32 accumulation, f32 gate math)."""
    emb = params["embedding"].astype(jnp.float32)
    w_ih_t = params["w_ih_t"].astype(jnp.float32).astype(matmul_dtype)
    w_hh_t = params["w_hh_t"].astype(jnp.float32).astype(matmul_dtype)
    b_ih = params["b_ih"].astype(jnp.float32)
    b_hh = params["b_hh"].astype(jnp.float32)
    H = emb.shape[1]

    x_seq = emb[word_inputs]                                   # (seq, H)
    gi_all = jnp.dot(x_seq.astype(matmul_dtype), w_ih_t,
                     preferred_element_type=jnp.float32) + b_ih
    h = hidden.reshape(1, H).astype(jnp.float32)
    outs = []
    for t in range(x_seq.shape[0]):
        gi = gi_all[t:t + 1]
        gh = jnp.dot(h.astype(matmul_dtype), w_hh_t,
                     preferred_element_type=jnp.float32) + b_hh
        i_r, i_z, i_n = gi[:, :H], gi[:, H:2 * H], gi[:, 2 * H:]
        h_r, h_z, h_n = gh[:, :H], gh[:, H:2 * H], gh[:, 2 * H:]
        r = jax.nn.sigmoid(i_r + h_r)
        z = jax.nn.sigmoid(i_z + h_z)
        n = jnp.tanh(i_n + r * h_n)
        h = (1.0 - z) * n + z * h
        outs.append(h)
    out = jnp.concatenate(outs, axis=0)
    return out.reshape(-1, 1, H), h.reshape(1, 1, H)


def init_params(key, input_size, hidden_size):
    """Deterministic init mirroring nn.Embedding / nn.GRU parameter shapes."""
    k_emb, k_wih, k_whh, k_bih, k_bhh = jax.random.split(key, 5)
    bound = 1.0 / jnp.sqrt(hidden_size)
    embedding = jax.random.normal(k_emb, (input_size, hidden_size), jnp.float32)
    w_ih = jax.random.uniform(k_wih, (3 * hidden_size, hidden_size),
                              jnp.float32, -bound, bound)   # weight_ih_l0
    w_hh = jax.random.uniform(k_whh, (3 * hidden_size, hidden_size),
                              jnp.float32, -bound, bound)   # weight_hh_l0
    b_ih = jax.random.uniform(k_bih, (1, 3 * hidden_size),
                              jnp.float32, -bound, bound)
    b_hh = jax.random.uniform(k_bhh, (1, 3 * hidden_size),
                              jnp.float32, -bound, bound)
    return {
        "embedding": embedding,
        "w_ih_t": w_ih.T,      # (H, 3H) so the kernel does x @ W
        "w_hh_t": w_hh.T,      # (H, 3H)
        "b_ih": b_ih,
        "b_hh": b_hh,
    }


if __name__ == "__main__":
    INPUT_SIZE = 16     # vocab size
    HIDDEN_SIZE = 32
    SEQ_LEN = 8
    N_LAYERS = 1

    key = jax.random.PRNGKey(0)
    k_params, k_ids = jax.random.split(key)
    params = init_params(k_params, INPUT_SIZE, HIDDEN_SIZE)
    prepped = prepare_params(params)          # one-time pad + bf16 cast

    word_inputs = jax.random.randint(k_ids, (SEQ_LEN,), 0, INPUT_SIZE,
                                     dtype=jnp.int32)
    hidden0 = jnp.zeros((N_LAYERS, 1, HIDDEN_SIZE), jnp.float32)  # init_hidden()

    output, hidden = encoder_rnn_forward(word_inputs, hidden0, prepped)
    output = jax.block_until_ready(output)
    hidden = jax.block_until_ready(hidden)

    assert output.shape == (SEQ_LEN, 1, HIDDEN_SIZE)
    assert hidden.shape == (N_LAYERS, 1, HIDDEN_SIZE)

    # 1) Tight check vs a reference that mirrors the kernel's bf16-MXU/f32-gate
    #    numerics exactly.
    ref_out_bf, ref_hid_bf = _reference_forward(word_inputs, hidden0, params,
                                                matmul_dtype=jnp.bfloat16)
    assert jnp.allclose(output, ref_out_bf, atol=2e-3, rtol=2e-3)
    assert jnp.allclose(hidden, ref_hid_bf, atol=2e-3, rtol=2e-3)

    # 2) Loose check vs the full-f32 (torch-faithful) reference — bounds the
    #    bf16 quantization error of the fast path.
    ref_out, ref_hid = _reference_forward(word_inputs, hidden0, params,
                                          matmul_dtype=jnp.float32)
    assert jnp.allclose(output, ref_out, atol=5e-2, rtol=5e-2)
    assert jnp.allclose(hidden, ref_hid, atol=5e-2, rtol=5e-2)

    print("KERNEL_OK")
</pallas_src>

<mosaic_0001>
module attributes {stable_mosaic.version = 11 : i64} {
  func.func @_encoder_gru_kernel(%arg0: memref<8xi32, #tpu.memory_space<smem>>, %arg1: memref<16x128xf32, #tpu.memory_space<any>>, %arg2: memref<128x384xbf16, #tpu.memory_space<vmem>>, %arg3: memref<128x384xbf16, #tpu.memory_space<vmem>>, %arg4: memref<1x384xf32, #tpu.memory_space<vmem>>, %arg5: memref<1x384xf32, #tpu.memory_space<vmem>>, %arg6: memref<1x128xf32, #tpu.memory_space<vmem>>, %arg7: memref<8x128xf32, #tpu.memory_space<vmem>>, %arg8: memref<1x128xf32, #tpu.memory_space<vmem>>, %arg9: memref<8x128xf32, #tpu.memory_space<vmem>>, %arg10: memref<8x!tpu.dma_semaphore, #tpu.memory_space<semaphore_mem>>) attributes {dimension_semantics = [], scalar_prefetch = 0 : i64, scratch_operands = 2 : i64, tpu.core_type = #tpu.core_type<tc>} {
    %c0 = arith.constant 0 : index
    %0 = memref.load %arg0[%c0] : memref<8xi32, #tpu.memory_space<smem>>
    %c0_i32 = arith.constant 0 : i32
    %c0_i32_0 = arith.constant 0 : i32
    %1 = tpu.memref_slice %arg1[%0, %c0_i32_0] : memref<16x128xf32, #tpu.memory_space<any>> -> memref<1x128xf32, #tpu.memory_space<any>>
    %c0_i32_1 = arith.constant 0 : i32
    %c0_i32_2 = arith.constant 0 : i32
    %2 = tpu.memref_slice %arg9[%c0_i32_1, %c0_i32_2] : memref<8x128xf32, #tpu.memory_space<vmem>> -> memref<1x128xf32, #tpu.memory_space<vmem>>
    %3 = tpu.memref_slice %arg10[%c0_i32] : memref<8x!tpu.dma_semaphore, #tpu.memory_space<semaphore_mem>> -> memref<1x!tpu.dma_semaphore, #tpu.memory_space<semaphore_mem>>
    %4 = tpu.memref_squeeze %3 : memref<1x!tpu.dma_semaphore, #tpu.memory_space<semaphore_mem>> -> memref<!tpu.dma_semaphore, #tpu.memory_space<semaphore_mem>>
    tpu.enqueue_dma source(%1 : memref<1x128xf32, #tpu.memory_space<any>>) target(%2 : memref<1x128xf32, #tpu.memory_space<vmem>>) target_semaphore(%4 : memref<!tpu.dma_semaphore, #tpu.memory_space<semaphore_mem>>)
    %c1 = arith.constant 1 : index
    %5 = memref.load %arg0[%c1] : memref<8xi32, #tpu.memory_space<smem>>
    %c1_i32 = arith.constant 1 : i32
    %c0_i32_3 = arith.constant 0 : i32
    %6 = tpu.memref_slice %arg1[%5, %c0_i32_3] : memref<16x128xf32, #tpu.memory_space<any>> -> memref<1x128xf32, #tpu.memory_space<any>>
    %c1_i32_4 = arith.constant 1 : i32
    %c0_i32_5 = arith.constant 0 : i32
    %7 = tpu.memref_slice %arg9[%c1_i32_4, %c0_i32_5] : memref<8x128xf32, #tpu.memory_space<vmem>> -> memref<1x128xf32, #tpu.memory_space<vmem>>
    %8 = tpu.memref_slice %arg10[%c1_i32] : memref<8x!tpu.dma_semaphore, #tpu.memory_space<semaphore_mem>> -> memref<1x!tpu.dma_semaphore, #tpu.memory_space<semaphore_mem>>
    %9 = tpu.memref_squeeze %8 : memref<1x!tpu.dma_semaphore, #tpu.memory_space<semaphore_mem>> -> memref<!tpu.dma_semaphore, #tpu.memory_space<semaphore_mem>>
    tpu.enqueue_dma source(%6 : memref<1x128xf32, #tpu.memory_space<any>>) target(%7 : memref<1x128xf32, #tpu.memory_space<vmem>>) target_semaphore(%9 : memref<!tpu.dma_semaphore, #tpu.memory_space<semaphore_mem>>)
    %c2 = arith.constant 2 : index
    %10 = memref.load %arg0[%c2] : memref<8xi32, #tpu.memory_space<smem>>
    %c2_i32 = arith.constant 2 : i32
    %c0_i32_6 = arith.constant 0 : i32
    %11 = tpu.memref_slice %arg1[%10, %c0_i32_6] : memref<16x128xf32, #tpu.memory_space<any>> -> memref<1x128xf32, #tpu.memory_space<any>>
    %c2_i32_7 = arith.constant 2 : i32
    %c0_i32_8 = arith.constant 0 : i32
    %12 = tpu.memref_slice %arg9[%c2_i32_7, %c0_i32_8] : memref<8x128xf32, #tpu.memory_space<vmem>> -> memref<1x128xf32, #tpu.memory_space<vmem>>
    %13 = tpu.memref_slice %arg10[%c2_i32] : memref<8x!tpu.dma_semaphore, #tpu.memory_space<semaphore_mem>> -> memref<1x!tpu.dma_semaphore, #tpu.memory_space<semaphore_mem>>
    %14 = tpu.memref_squeeze %13 : memref<1x!tpu.dma_semaphore, #tpu.memory_space<semaphore_mem>> -> memref<!tpu.dma_semaphore, #tpu.memory_space<semaphore_mem>>
    tpu.enqueue_dma source(%11 : memref<1x128xf32, #tpu.memory_space<any>>) target(%12 : memref<1x128xf32, #tpu.memory_space<vmem>>) target_semaphore(%14 : memref<!tpu.dma_semaphore, #tpu.memory_space<semaphore_mem>>)
    %c3 = arith.constant 3 : index
    %15 = memref.load %arg0[%c3] : memref<8xi32, #tpu.memory_space<smem>>
    %c3_i32 = arith.constant 3 : i32
    %c0_i32_9 = arith.constant 0 : i32
    %16 = tpu.memref_slice %arg1[%15, %c0_i32_9] : memref<16x128xf32, #tpu.memory_space<any>> -> memref<1x128xf32, #tpu.memory_space<any>>
    %c3_i32_10 = arith.constant 3 : i32
    %c0_i32_11 = arith.constant 0 : i32
    %17 = tpu.memref_slice %arg9[%c3_i32_10, %c0_i32_11] : memref<8x128xf32, #tpu.memory_space<vmem>> -> memref<1x128xf32, #tpu.memory_space<vmem>>
    %18 = tpu.memref_slice %arg10[%c3_i32] : memref<8x!tpu.dma_semaphore, #tpu.memory_space<semaphore_mem>> -> memref<1x!tpu.dma_semaphore, #tpu.memory_space<semaphore_mem>>
    %19 = tpu.memref_squeeze %18 : memref<1x!tpu.dma_semaphore, #tpu.memory_space<semaphore_mem>> -> memref<!tpu.dma_semaphore, #tpu.memory_space<semaphore_mem>>
    tpu.enqueue_dma source(%16 : memref<1x128xf32, #tpu.memory_space<any>>) target(%17 : memref<1x128xf32, #tpu.memory_space<vmem>>) target_semaphore(%19 : memref<!tpu.dma_semaphore, #tpu.memory_space<semaphore_mem>>)
    %c4 = arith.constant 4 : index
    %20 = memref.load %arg0[%c4] : memref<8xi32, #tpu.memory_space<smem>>
    %c4_i32 = arith.constant 4 : i32
    %c0_i32_12 = arith.constant 0 : i32
    %21 = tpu.memref_slice %arg1[%20, %c0_i32_12] : memref<16x128xf32, #tpu.memory_space<any>> -> memref<1x128xf32, #tpu.memory_space<any>>
    %c4_i32_13 = arith.constant 4 : i32
    %c0_i32_14 = arith.constant 0 : i32
    %22 = tpu.memref_slice %arg9[%c4_i32_13, %c0_i32_14] : memref<8x128xf32, #tpu.memory_space<vmem>> -> memref<1x128xf32, #tpu.memory_space<vmem>>
    %23 = tpu.memref_slice %arg10[%c4_i32] : memref<8x!tpu.dma_semaphore, #tpu.memory_space<semaphore_mem>> -> memref<1x!tpu.dma_semaphore, #tpu.memory_space<semaphore_mem>>
    %24 = tpu.memref_squeeze %23 : memref<1x!tpu.dma_semaphore, #tpu.memory_space<semaphore_mem>> -> memref<!tpu.dma_semaphore, #tpu.memory_space<semaphore_mem>>
    tpu.enqueue_dma source(%21 : memref<1x128xf32, #tpu.memory_space<any>>) target(%22 : memref<1x128xf32, #tpu.memory_space<vmem>>) target_semaphore(%24 : memref<!tpu.dma_semaphore, #tpu.memory_space<semaphore_mem>>)
    %c5 = arith.constant 5 : index
    %25 = memref.load %arg0[%c5] : memref<8xi32, #tpu.memory_space<smem>>
    %c5_i32 = arith.constant 5 : i32
    %c0_i32_15 = arith.constant 0 : i32
    %26 = tpu.memref_slice %arg1[%25, %c0_i32_15] : memref<16x128xf32, #tpu.memory_space<any>> -> memref<1x128xf32, #tpu.memory_space<any>>
    %c5_i32_16 = arith.constant 5 : i32
    %c0_i32_17 = arith.constant 0 : i32
    %27 = tpu.memref_slice %arg9[%c5_i32_16, %c0_i32_17] : memref<8x128xf32, #tpu.memory_space<vmem>> -> memref<1x128xf32, #tpu.memory_space<vmem>>
    %28 = tpu.memref_slice %arg10[%c5_i32] : memref<8x!tpu.dma_semaphore, #tpu.memory_space<semaphore_mem>> -> memref<1x!tpu.dma_semaphore, #tpu.memory_space<semaphore_mem>>
    %29 = tpu.memref_squeeze %28 : memref<1x!tpu.dma_semaphore, #tpu.memory_space<semaphore_mem>> -> memref<!tpu.dma_semaphore, #tpu.memory_space<semaphore_mem>>
    tpu.enqueue_dma source(%26 : memref<1x128xf32, #tpu.memory_space<any>>) target(%27 : memref<1x128xf32, #tpu.memory_space<vmem>>) target_semaphore(%29 : memref<!tpu.dma_semaphore, #tpu.memory_space<semaphore_mem>>)
    %c6 = arith.constant 6 : index
    %30 = memref.load %arg0[%c6] : memref<8xi32, #tpu.memory_space<smem>>
    %c6_i32 = arith.constant 6 : i32
    %c0_i32_18 = arith.constant 0 : i32
    %31 = tpu.memref_slice %arg1[%30, %c0_i32_18] : memref<16x128xf32, #tpu.memory_space<any>> -> memref<1x128xf32, #tpu.memory_space<any>>
    %c6_i32_19 = arith.constant 6 : i32
    %c0_i32_20 = arith.constant 0 : i32
    %32 = tpu.memref_slice %arg9[%c6_i32_19, %c0_i32_20] : memref<8x128xf32, #tpu.memory_space<vmem>> -> memref<1x128xf32, #tpu.memory_space<vmem>>
    %33 = tpu.memref_slice %arg10[%c6_i32] : memref<8x!tpu.dma_semaphore, #tpu.memory_space<semaphore_mem>> -> memref<1x!tpu.dma_semaphore, #tpu.memory_space<semaphore_mem>>
    %34 = tpu.memref_squeeze %33 : memref<1x!tpu.dma_semaphore, #tpu.memory_space<semaphore_mem>> -> memref<!tpu.dma_semaphore, #tpu.memory_space<semaphore_mem>>
    tpu.enqueue_dma source(%31 : memref<1x128xf32, #tpu.memory_space<any>>) target(%32 : memref<1x128xf32, #tpu.memory_space<vmem>>) target_semaphore(%34 : memref<!tpu.dma_semaphore, #tpu.memory_space<semaphore_mem>>)
    %c7 = arith.constant 7 : index
    %35 = memref.load %arg0[%c7] : memref<8xi32, #tpu.memory_space<smem>>
    %c7_i32 = arith.constant 7 : i32
    %c0_i32_21 = arith.constant 0 : i32
    %36 = tpu.memref_slice %arg1[%35, %c0_i32_21] : memref<16x128xf32, #tpu.memory_space<any>> -> memref<1x128xf32, #tpu.memory_space<any>>
    %c7_i32_22 = arith.constant 7 : i32
    %c0_i32_23 = arith.constant 0 : i32
    %37 = tpu.memref_slice %arg9[%c7_i32_22, %c0_i32_23] : memref<8x128xf32, #tpu.memory_space<vmem>> -> memref<1x128xf32, #tpu.memory_space<vmem>>
    %38 = tpu.memref_slice %arg10[%c7_i32] : memref<8x!tpu.dma_semaphore, #tpu.memory_space<semaphore_mem>> -> memref<1x!tpu.dma_semaphore, #tpu.memory_space<semaphore_mem>>
    %39 = tpu.memref_squeeze %38 : memref<1x!tpu.dma_semaphore, #tpu.memory_space<semaphore_mem>> -> memref<!tpu.dma_semaphore, #tpu.memory_space<semaphore_mem>>
    tpu.enqueue_dma source(%36 : memref<1x128xf32, #tpu.memory_space<any>>) target(%37 : memref<1x128xf32, #tpu.memory_space<vmem>>) target_semaphore(%39 : memref<!tpu.dma_semaphore, #tpu.memory_space<semaphore_mem>>)
    %c0_24 = arith.constant 0 : index
    %c0_25 = arith.constant 0 : index
    %40 = vector.load %arg2[%c0_24, %c0_25] : memref<128x384xbf16, #tpu.memory_space<vmem>>, vector<128x384xbf16>
    %c0_26 = arith.constant 0 : index
    %c0_27 = arith.constant 0 : index
    %41 = vector.load %arg3[%c0_26, %c0_27] : memref<128x384xbf16, #tpu.memory_space<vmem>>, vector<128x384xbf16>
    %c0_28 = arith.constant 0 : index
    %c0_29 = arith.constant 0 : index
    %42 = vector.load %arg4[%c0_28, %c0_29] : memref<1x384xf32, #tpu.memory_space<vmem>>, vector<1x384xf32>
    %c0_30 = arith.constant 0 : index
    %c0_31 = arith.constant 0 : index
    %43 = vector.load %arg5[%c0_30, %c0_31] : memref<1x384xf32, #tpu.memory_space<vmem>>, vector<1x384xf32>
    %c0_32 = arith.constant 0 : index
    %c0_33 = arith.constant 0 : index
    %44 = vector.load %arg6[%c0_32, %c0_33] : memref<1x128xf32, #tpu.memory_space<vmem>>, vector<1x128xf32>
    %45 = arith.truncf %44 : vector<1x128xf32> to vector<1x128xbf16>
    %cst = arith.constant dense<0.000000e+00> : vector<1x384xf32>
    %46 = tpu.matmul %45, %41, %cst {dimension_numbers = #tpu.dot_dimension_numbers<[1], [0], [0], [1], [0, 0, 1, 1], [], []>} : vector<1x128xbf16>, vector<128x384xbf16>, vector<1x384xf32> -> vector<1x384xf32>
    %47 = arith.addf %46, %43 : vector<1x384xf32>
    %c0_i32_34 = arith.constant 0 : i32
    %c0_i32_35 = arith.constant 0 : i32
    %c0_i32_36 = arith.constant 0 : i32
    %48 = tpu.memref_slice %arg1[%c0_i32_35, %c0_i32_36] : memref<16x128xf32, #tpu.memory_space<any>> -> memref<1x128xf32, #tpu.memory_space<any>>
    %c0_i32_37 = arith.constant 0 : i32
    %c0_i32_38 = arith.constant 0 : i32
    %49 = tpu.memref_slice %arg9[%c0_i32_37, %c0_i32_38] : memref<8x128xf32, #tpu.memory_space<vmem>> -> memref<1x128xf32, #tpu.memory_space<vmem>>
    %50 = tpu.memref_slice %arg10[%c0_i32_34] : memref<8x!tpu.dma_semaphore, #tpu.memory_space<semaphore_mem>> -> memref<1x!tpu.dma_semaphore, #tpu.memory_space<semaphore_mem>>
    %51 = tpu.memref_squeeze %50 : memref<1x!tpu.dma_semaphore, #tpu.memory_space<semaphore_mem>> -> memref<!tpu.dma_semaphore, #tpu.memory_space<semaphore_mem>>
    tpu.wait_dma2 semaphore(%51 : memref<!tpu.dma_semaphore, #tpu.memory_space<semaphore_mem>>) src(%48 : memref<1x128xf32, #tpu.memory_space<any>>) dst(%49 : memref<1x128xf32, #tpu.memory_space<vmem>>)
    %c1_i32_39 = arith.constant 1 : i32
    %c0_i32_40 = arith.constant 0 : i32
    %c0_i32_41 = arith.constant 0 : i32
    %52 = tpu.memref_slice %arg1[%c0_i32_40, %c0_i32_41] : memref<16x128xf32, #tpu.memory_space<any>> -> memref<1x128xf32, #tpu.memory_space<any>>
    %c1_i32_42 = arith.constant 1 : i32
    %c0_i32_43 = arith.constant 0 : i32
    %53 = tpu.memref_slice %arg9[%c1_i32_42, %c0_i32_43] : memref<8x128xf32, #tpu.memory_space<vmem>> -> memref<1x128xf32, #tpu.memory_space<vmem>>
    %54 = tpu.memref_slice %arg10[%c1_i32_39] : memref<8x!tpu.dma_semaphore, #tpu.memory_space<semaphore_mem>> -> memref<1x!tpu.dma_semaphore, #tpu.memory_space<semaphore_mem>>
    %55 = tpu.memref_squeeze %54 : memref<1x!tpu.dma_semaphore, #tpu.memory_space<semaphore_mem>> -> memref<!tpu.dma_semaphore, #tpu.memory_space<semaphore_mem>>
    tpu.wait_dma2 semaphore(%55 : memref<!tpu.dma_semaphore, #tpu.memory_space<semaphore_mem>>) src(%52 : memref<1x128xf32, #tpu.memory_space<any>>) dst(%53 : memref<1x128xf32, #tpu.memory_space<vmem>>)
    %c2_i32_44 = arith.constant 2 : i32
    %c0_i32_45 = arith.constant 0 : i32
    %c0_i32_46 = arith.constant 0 : i32
    %56 = tpu.memref_slice %arg1[%c0_i32_45, %c0_i32_46] : memref<16x128xf32, #tpu.memory_space<any>> -> memref<1x128xf32, #tpu.memory_space<any>>
    %c2_i32_47 = arith.constant 2 : i32
    %c0_i32_48 = arith.constant 0 : i32
    %57 = tpu.memref_slice %arg9[%c2_i32_47, %c0_i32_48] : memref<8x128xf32, #tpu.memory_space<vmem>> -> memref<1x128xf32, #tpu.memory_space<vmem>>
    %58 = tpu.memref_slice %arg10[%c2_i32_44] : memref<8x!tpu.dma_semaphore, #tpu.memory_space<semaphore_mem>> -> memref<1x!tpu.dma_semaphore, #tpu.memory_space<semaphore_mem>>
    %59 = tpu.memref_squeeze %58 : memref<1x!tpu.dma_semaphore, #tpu.memory_space<semaphore_mem>> -> memref<!tpu.dma_semaphore, #tpu.memory_space<semaphore_mem>>
    tpu.wait_dma2 semaphore(%59 : memref<!tpu.dma_semaphore, #tpu.memory_space<semaphore_mem>>) src(%56 : memref<1x128xf32, #tpu.memory_space<any>>) dst(%57 : memref<1x128xf32, #tpu.memory_space<vmem>>)
    %c3_i32_49 = arith.constant 3 : i32
    %c0_i32_50 = arith.constant 0 : i32
    %c0_i32_51 = arith.constant 0 : i32
    %60 = tpu.memref_slice %arg1[%c0_i32_50, %c0_i32_51] : memref<16x128xf32, #tpu.memory_space<any>> -> memref<1x128xf32, #tpu.memory_space<any>>
    %c3_i32_52 = arith.constant 3 : i32
    %c0_i32_53 = arith.constant 0 : i32
    %61 = tpu.memref_slice %arg9[%c3_i32_52, %c0_i32_53] : memref<8x128xf32, #tpu.memory_space<vmem>> -> memref<1x128xf32, #tpu.memory_space<vmem>>
    %62 = tpu.memref_slice %arg10[%c3_i32_49] : memref<8x!tpu.dma_semaphore, #tpu.memory_space<semaphore_mem>> -> memref<1x!tpu.dma_semaphore, #tpu.memory_space<semaphore_mem>>
    %63 = tpu.memref_squeeze %62 : memref<1x!tpu.dma_semaphore, #tpu.memory_space<semaphore_mem>> -> memref<!tpu.dma_semaphore, #tpu.memory_space<semaphore_mem>>
    tpu.wait_dma2 semaphore(%63 : memref<!tpu.dma_semaphore, #tpu.memory_space<semaphore_mem>>) src(%60 : memref<1x128xf32, #tpu.memory_space<any>>) dst(%61 : memref<1x128xf32, #tpu.memory_space<vmem>>)
    %c4_i32_54 = arith.constant 4 : i32
    %c0_i32_55 = arith.constant 0 : i32
    %c0_i32_56 = arith.constant 0 : i32
    %64 = tpu.memref_slice %arg1[%c0_i32_55, %c0_i32_56] : memref<16x128xf32, #tpu.memory_space<any>> -> memref<1x128xf32, #tpu.memory_space<any>>
    %c4_i32_57 = arith.constant 4 : i32
    %c0_i32_58 = arith.constant 0 : i32
    %65 = tpu.memref_slice %arg9[%c4_i32_57, %c0_i32_58] : memref<8x128xf32, #tpu.memory_space<vmem>> -> memref<1x128xf32, #tpu.memory_space<vmem>>
    %66 = tpu.memref_slice %arg10[%c4_i32_54] : memref<8x!tpu.dma_semaphore, #tpu.memory_space<semaphore_mem>> -> memref<1x!tpu.dma_semaphore, #tpu.memory_space<semaphore_mem>>
    %67 = tpu.memref_squeeze %66 : memref<1x!tpu.dma_semaphore, #tpu.memory_space<semaphore_mem>> -> memref<!tpu.dma_semaphore, #tpu.memory_space<semaphore_mem>>
    tpu.wait_dma2 semaphore(%67 : memref<!tpu.dma_semaphore, #tpu.memory_space<semaphore_mem>>) src(%64 : memref<1x128xf32, #tpu.memory_space<any>>) dst(%65 : memref<1x128xf32, #tpu.memory_space<vmem>>)
    %c5_i32_59 = arith.constant 5 : i32
    %c0_i32_60 = arith.constant 0 : i32
    %c0_i32_61 = arith.constant 0 : i32
    %68 = tpu.memref_slice %arg1[%c0_i32_60, %c0_i32_61] : memref<16x128xf32, #tpu.memory_space<any>> -> memref<1x128xf32, #tpu.memory_space<any>>
    %c5_i32_62 = arith.constant 5 : i32
    %c0_i32_63 = arith.constant 0 : i32
    %69 = tpu.memref_slice %arg9[%c5_i32_62, %c0_i32_63] : memref<8x128xf32, #tpu.memory_space<vmem>> -> memref<1x128xf32, #tpu.memory_space<vmem>>
    %70 = tpu.memref_slice %arg10[%c5_i32_59] : memref<8x!tpu.dma_semaphore, #tpu.memory_space<semaphore_mem>> -> memref<1x!tpu.dma_semaphore, #tpu.memory_space<semaphore_mem>>
    %71 = tpu.memref_squeeze %70 : memref<1x!tpu.dma_semaphore, #tpu.memory_space<semaphore_mem>> -> memref<!tpu.dma_semaphore, #tpu.memory_space<semaphore_mem>>
    tpu.wait_dma2 semaphore(%71 : memref<!tpu.dma_semaphore, #tpu.memory_space<semaphore_mem>>) src(%68 : memref<1x128xf32, #tpu.memory_space<any>>) dst(%69 : memref<1x128xf32, #tpu.memory_space<vmem>>)
    %c6_i32_64 = arith.constant 6 : i32
    %c0_i32_65 = arith.constant 0 : i32
    %c0_i32_66 = arith.constant 0 : i32
    %72 = tpu.memref_slice %arg1[%c0_i32_65, %c0_i32_66] : memref<16x128xf32, #tpu.memory_space<any>> -> memref<1x128xf32, #tpu.memory_space<any>>
    %c6_i32_67 = arith.constant 6 : i32
    %c0_i32_68 = arith.constant 0 : i32
    %73 = tpu.memref_slice %arg9[%c6_i32_67, %c0_i32_68] : memref<8x128xf32, #tpu.memory_space<vmem>> -> memref<1x128xf32, #tpu.memory_space<vmem>>
    %74 = tpu.memref_slice %arg10[%c6_i32_64] : memref<8x!tpu.dma_semaphore, #tpu.memory_space<semaphore_mem>> -> memref<1x!tpu.dma_semaphore, #tpu.memory_space<semaphore_mem>>
    %75 = tpu.memref_squeeze %74 : memref<1x!tpu.dma_semaphore, #tpu.memory_space<semaphore_mem>> -> memref<!tpu.dma_semaphore, #tpu.memory_space<semaphore_mem>>
    tpu.wait_dma2 semaphore(%75 : memref<!tpu.dma_semaphore, #tpu.memory_space<semaphore_mem>>) src(%72 : memref<1x128xf32, #tpu.memory_space<any>>) dst(%73 : memref<1x128xf32, #tpu.memory_space<vmem>>)
    %c7_i32_69 = arith.constant 7 : i32
    %c0_i32_70 = arith.constant 0 : i32
    %c0_i32_71 = arith.constant 0 : i32
    %76 = tpu.memref_slice %arg1[%c0_i32_70, %c0_i32_71] : memref<16x128xf32, #tpu.memory_space<any>> -> memref<1x128xf32, #tpu.memory_space<any>>
    %c7_i32_72 = arith.constant 7 : i32
    %c0_i32_73 = arith.constant 0 : i32
    %77 = tpu.memref_slice %arg9[%c7_i32_72, %c0_i32_73] : memref<8x128xf32, #tpu.memory_space<vmem>> -> memref<1x128xf32, #tpu.memory_space<vmem>>
    %78 = tpu.memref_slice %arg10[%c7_i32_69] : memref<8x!tpu.dma_semaphore, #tpu.memory_space<semaphore_mem>> -> memref<1x!tpu.dma_semaphore, #tpu.memory_space<semaphore_mem>>
    %79 = tpu.memref_squeeze %78 : memref<1x!tpu.dma_semaphore, #tpu.memory_space<semaphore_mem>> -> memref<!tpu.dma_semaphore, #tpu.memory_space<semaphore_mem>>
    tpu.wait_dma2 semaphore(%79 : memref<!tpu.dma_semaphore, #tpu.memory_space<semaphore_mem>>) src(%76 : memref<1x128xf32, #tpu.memory_space<any>>) dst(%77 : memref<1x128xf32, #tpu.memory_space<vmem>>)
    %c0_74 = arith.constant 0 : index
    %c0_75 = arith.constant 0 : index
    %80 = vector.load %arg9[%c0_74, %c0_75] : memref<8x128xf32, #tpu.memory_space<vmem>>, vector<8x128xf32>
    %81 = arith.truncf %80 : vector<8x128xf32> to vector<8x128xbf16>
    %cst_76 = arith.constant dense<0.000000e+00> : vector<8x384xf32>
    %82 = tpu.matmul %81, %40, %cst_76 {dimension_numbers = #tpu.dot_dimension_numbers<[1], [0], [0], [1], [0, 0, 1, 1], [], []>} : vector<8x128xbf16>, vector<128x384xbf16>, vector<8x384xf32> -> vector<8x384xf32>
    %83 = vector.broadcast %42 : vector<1x384xf32> to vector<8x384xf32>
    %84 = arith.addf %82, %83 : vector<8x384xf32>
    %85 = vector.extract_strided_slice %84 {offsets = [0, 0], sizes = [1, 384], strides = [1, 1]} : vector<8x384xf32> to vector<1x384xf32>
    %86 = vector.extract_strided_slice %85 {offsets = [0, 0], sizes = [1, 128], strides = [1, 1]} : vector<1x384xf32> to vector<1x128xf32>
    %87 = vector.extract_strided_slice %85 {offsets = [0, 128], sizes = [1, 128], strides = [1, 1]} : vector<1x384xf32> to vector<1x128xf32>
    %88 = vector.extract_strided_slice %85 {offsets = [0, 256], sizes = [1, 128], strides = [1, 1]} : vector<1x384xf32> to vector<1x128xf32>
    %89 = vector.extract_strided_slice %47 {offsets = [0, 0], sizes = [1, 128], strides = [1, 1]} : vector<1x384xf32> to vector<1x128xf32>
    %90 = vector.extract_strided_slice %47 {offsets = [0, 128], sizes = [1, 128], strides = [1, 1]} : vector<1x384xf32> to vector<1x128xf32>
    %91 = vector.extract_strided_slice %47 {offsets = [0, 256], sizes = [1, 128], strides = [1, 1]} : vector<1x384xf32> to vector<1x128xf32>
    %92 = arith.addf %86, %89 : vector<1x128xf32>
    %93 = arith.negf %92 : vector<1x128xf32>
    %94 = math.exp %93 : vector<1x128xf32>
    %cst_77 = arith.constant 1.000000e+00 : f32
    %95 = vector.broadcast %cst_77 : f32 to vector<1x128xf32>
    %96 = arith.addf %95, %94 : vector<1x128xf32>
    %97 = arith.divf %95, %96 : vector<1x128xf32>
    %98 = arith.addf %87, %90 : vector<1x128xf32>
    %99 = arith.negf %98 : vector<1x128xf32>
    %100 = math.exp %99 : vector<1x128xf32>
    %cst_78 = arith.constant 1.000000e+00 : f32
    %101 = vector.broadcast %cst_78 : f32 to vector<1x128xf32>
    %102 = arith.addf %101, %100 : vector<1x128xf32>
    %103 = arith.divf %101, %102 : vector<1x128xf32>
    %104 = arith.mulf %97, %91 : vector<1x128xf32>
    %105 = arith.addf %88, %104 : vector<1x128xf32>
    %106 = math.tanh %105 : vector<1x128xf32>
    %cst_79 = arith.constant 1.000000e+00 : f32
    %107 = vector.broadcast %cst_79 : f32 to vector<1x128xf32>
    %108 = arith.subf %107, %103 : vector<1x128xf32>
    %109 = arith.mulf %108, %106 : vector<1x128xf32>
    %110 = arith.mulf %103, %44 : vector<1x128xf32>
    %111 = arith.addf %109, %110 : vector<1x128xf32>
    %112 = arith.truncf %111 : vector<1x128xf32> to vector<1x128xbf16>
    %cst_80 = arith.constant dense<0.000000e+00> : vector<1x384xf32>
    %113 = tpu.matmul %112, %41, %cst_80 {dimension_numbers = #tpu.dot_dimension_numbers<[1], [0], [0], [1], [0, 0, 1, 1], [], []>} : vector<1x128xbf16>, vector<128x384xbf16>, vector<1x384xf32> -> vector<1x384xf32>
    %114 = arith.addf %113, %43 : vector<1x384xf32>
    %115 = vector.extract_strided_slice %84 {offsets = [1, 0], sizes = [1, 384], strides = [1, 1]} : vector<8x384xf32> to vector<1x384xf32>
    %116 = vector.extract_strided_slice %115 {offsets = [0, 0], sizes = [1, 128], strides = [1, 1]} : vector<1x384xf32> to vector<1x128xf32>
    %117 = vector.extract_strided_slice %115 {offsets = [0, 128], sizes = [1, 128], strides = [1, 1]} : vector<1x384xf32> to vector<1x128xf32>
    %118 = vector.extract_strided_slice %115 {offsets = [0, 256], sizes = [1, 128], strides = [1, 1]} : vector<1x384xf32> to vector<1x128xf32>
    %119 = vector.extract_strided_slice %114 {offsets = [0, 0], sizes = [1, 128], strides = [1, 1]} : vector<1x384xf32> to vector<1x128xf32>
    %120 = vector.extract_strided_slice %114 {offsets = [0, 128], sizes = [1, 128], strides = [1, 1]} : vector<1x384xf32> to vector<1x128xf32>
    %121 = vector.extract_strided_slice %114 {offsets = [0, 256], sizes = [1, 128], strides = [1, 1]} : vector<1x384xf32> to vector<1x128xf32>
    %122 = arith.addf %116, %119 : vector<1x128xf32>
    %123 = arith.negf %122 : vector<1x128xf32>
    %124 = math.exp %123 : vector<1x128xf32>
    %cst_81 = arith.constant 1.000000e+00 : f32
    %125 = vector.broadcast %cst_81 : f32 to vector<1x128xf32>
    %126 = arith.addf %125, %124 : vector<1x128xf32>
    %127 = arith.divf %125, %126 : vector<1x128xf32>
    %128 = arith.addf %117, %120 : vector<1x128xf32>
    %129 = arith.negf %128 : vector<1x128xf32>
    %130 = math.exp %129 : vector<1x128xf32>
    %cst_82 = arith.constant 1.000000e+00 : f32
    %131 = vector.broadcast %cst_82 : f32 to vector<1x128xf32>
    %132 = arith.addf %131, %130 : vector<1x128xf32>
    %133 = arith.divf %131, %132 : vector<1x128xf32>
    %134 = arith.mulf %127, %121 : vector<1x128xf32>
    %135 = arith.addf %118, %134 : vector<1x128xf32>
    %136 = math.tanh %135 : vector<1x128xf32>
    %cst_83 = arith.constant 1.000000e+00 : f32
    %137 = vector.broadcast %cst_83 : f32 to vector<1x128xf32>
    %138 = arith.subf %137, %133 : vector<1x128xf32>
    %139 = arith.mulf %138, %136 : vector<1x128xf32>
    %140 = arith.mulf %133, %111 : vector<1x128xf32>
    %141 = arith.addf %139, %140 : vector<1x128xf32>
    %142 = arith.truncf %141 : vector<1x128xf32> to vector<1x128xbf16>
    %cst_84 = arith.constant dense<0.000000e+00> : vector<1x384xf32>
    %143 = tpu.matmul %142, %41, %cst_84 {dimension_numbers = #tpu.dot_dimension_numbers<[1], [0], [0], [1], [0, 0, 1, 1], [], []>} : vector<1x128xbf16>, vector<128x384xbf16>, vector<1x384xf32> -> vector<1x384xf32>
    %144 = arith.addf %143, %43 : vector<1x384xf32>
    %145 = vector.extract_strided_slice %84 {offsets = [2, 0], sizes = [1, 384], strides = [1, 1]} : vector<8x384xf32> to vector<1x384xf32>
    %146 = vector.extract_strided_slice %145 {offsets = [0, 0], sizes = [1, 128], strides = [1, 1]} : vector<1x384xf32> to vector<1x128xf32>
    %147 = vector.extract_strided_slice %145 {offsets = [0, 128], sizes = [1, 128], strides = [1, 1]} : vector<1x384xf32> to vector<1x128xf32>
    %148 = vector.extract_strided_slice %145 {offsets = [0, 256], sizes = [1, 128], strides = [1, 1]} : vector<1x384xf32> to vector<1x128xf32>
    %149 = vector.extract_strided_slice %144 {offsets = [0, 0], sizes = [1, 128], strides = [1, 1]} : vector<1x384xf32> to vector<1x128xf32>
    %150 = vector.extract_strided_slice %144 {offsets = [0, 128], sizes = [1, 128], strides = [1, 1]} : vector<1x384xf32> to vector<1x128xf32>
    %151 = vector.extract_strided_slice %144 {offsets = [0, 256], sizes = [1, 128], strides = [1, 1]} : vector<1x384xf32> to vector<1x128xf32>
    %152 = arith.addf %146, %149 : vector<1x128xf32>
    %153 = arith.negf %152 : vector<1x128xf32>
    %154 = math.exp %153 : vector<1x128xf32>
    %cst_85 = arith.constant 1.000000e+00 : f32
    %155 = vector.broadcast %cst_85 : f32 to vector<1x128xf32>
    %156 = arith.addf %155, %154 : vector<1x128xf32>
    %157 = arith.divf %155, %156 : vector<1x128xf32>
    %158 = arith.addf %147, %150 : vector<1x128xf32>
    %159 = arith.negf %158 : vector<1x128xf32>
    %160 = math.exp %159 : vector<1x128xf32>
    %cst_86 = arith.constant 1.000000e+00 : f32
    %161 = vector.broadcast %cst_86 : f32 to vector<1x128xf32>
    %162 = arith.addf %161, %160 : vector<1x128xf32>
    %163 = arith.divf %161, %162 : vector<1x128xf32>
    %164 = arith.mulf %157, %151 : vector<1x128xf32>
    %165 = arith.addf %148, %164 : vector<1x128xf32>
    %166 = math.tanh %165 : vector<1x128xf32>
    %cst_87 = arith.constant 1.000000e+00 : f32
    %167 = vector.broadcast %cst_87 : f32 to vector<1x128xf32>
    %168 = arith.subf %167, %163 : vector<1x128xf32>
    %169 = arith.mulf %168, %166 : vector<1x128xf32>
    %170 = arith.mulf %163, %141 : vector<1x128xf32>
    %171 = arith.addf %169, %170 : vector<1x128xf32>
    %172 = arith.truncf %171 : vector<1x128xf32> to vector<1x128xbf16>
    %cst_88 = arith.constant dense<0.000000e+00> : vector<1x384xf32>
    %173 = tpu.matmul %172, %41, %cst_88 {dimension_numbers = #tpu.dot_dimension_numbers<[1], [0], [0], [1], [0, 0, 1, 1], [], []>} : vector<1x128xbf16>, vector<128x384xbf16>, vector<1x384xf32> -> vector<1x384xf32>
    %174 = arith.addf %173, %43 : vector<1x384xf32>
    %175 = vector.extract_strided_slice %84 {offsets = [3, 0], sizes = [1, 384], strides = [1, 1]} : vector<8x384xf32> to vector<1x384xf32>
    %176 = vector.extract_strided_slice %175 {offsets = [0, 0], sizes = [1, 128], strides = [1, 1]} : vector<1x384xf32> to vector<1x128xf32>
    %177 = vector.extract_strided_slice %175 {offsets = [0, 128], sizes = [1, 128], strides = [1, 1]} : vector<1x384xf32> to vector<1x128xf32>
    %178 = vector.extract_strided_slice %175 {offsets = [0, 256], sizes = [1, 128], strides = [1, 1]} : vector<1x384xf32> to vector<1x128xf32>
    %179 = vector.extract_strided_slice %174 {offsets = [0, 0], sizes = [1, 128], strides = [1, 1]} : vector<1x384xf32> to vector<1x128xf32>
    %180 = vector.extract_strided_slice %174 {offsets = [0, 128], sizes = [1, 128], strides = [1, 1]} : vector<1x384xf32> to vector<1x128xf32>
    %181 = vector.extract_strided_slice %174 {offsets = [0, 256], sizes = [1, 128], strides = [1, 1]} : vector<1x384xf32> to vector<1x128xf32>
    %182 = arith.addf %176, %179 : vector<1x128xf32>
    %183 = arith.negf %182 : vector<1x128xf32>
    %184 = math.exp %183 : vector<1x128xf32>
    %cst_89 = arith.constant 1.000000e+00 : f32
    %185 = vector.broadcast %cst_89 : f32 to vector<1x128xf32>
    %186 = arith.addf %185, %184 : vector<1x128xf32>
    %187 = arith.divf %185, %186 : vector<1x128xf32>
    %188 = arith.addf %177, %180 : vector<1x128xf32>
    %189 = arith.negf %188 : vector<1x128xf32>
    %190 = math.exp %189 : vector<1x128xf32>
    %cst_90 = arith.constant 1.000000e+00 : f32
    %191 = vector.broadcast %cst_90 : f32 to vector<1x128xf32>
    %192 = arith.addf %191, %190 : vector<1x128xf32>
    %193 = arith.divf %191, %192 : vector<1x128xf32>
    %194 = arith.mulf %187, %181 : vector<1x128xf32>
    %195 = arith.addf %178, %194 : vector<1x128xf32>
    %196 = math.tanh %195 : vector<1x128xf32>
    %cst_91 = arith.constant 1.000000e+00 : f32
    %197 = vector.broadcast %cst_91 : f32 to vector<1x128xf32>
    %198 = arith.subf %197, %193 : vector<1x128xf32>
    %199 = arith.mulf %198, %196 : vector<1x128xf32>
    %200 = arith.mulf %193, %171 : vector<1x128xf32>
    %201 = arith.addf %199, %200 : vector<1x128xf32>
    %202 = arith.truncf %201 : vector<1x128xf32> to vector<1x128xbf16>
    %cst_92 = arith.constant dense<0.000000e+00> : vector<1x384xf32>
    %203 = tpu.matmul %202, %41, %cst_92 {dimension_numbers = #tpu.dot_dimension_numbers<[1], [0], [0], [1], [0, 0, 1, 1], [], []>} : vector<1x128xbf16>, vector<128x384xbf16>, vector<1x384xf32> -> vector<1x384xf32>
    %204 = arith.addf %203, %43 : vector<1x384xf32>
    %205 = vector.extract_strided_slice %84 {offsets = [4, 0], sizes = [1, 384], strides = [1, 1]} : vector<8x384xf32> to vector<1x384xf32>
    %206 = vector.extract_strided_slice %205 {offsets = [0, 0], sizes = [1, 128], strides = [1, 1]} : vector<1x384xf32> to vector<1x128xf32>
    %207 = vector.extract_strided_slice %205 {offsets = [0, 128], sizes = [1, 128], strides = [1, 1]} : vector<1x384xf32> to vector<1x128xf32>
    %208 = vector.extract_strided_slice %205 {offsets = [0, 256], sizes = [1, 128], strides = [1, 1]} : vector<1x384xf32> to vector<1x128xf32>
    %209 = vector.extract_strided_slice %204 {offsets = [0, 0], sizes = [1, 128], strides = [1, 1]} : vector<1x384xf32> to vector<1x128xf32>
    %210 = vector.extract_strided_slice %204 {offsets = [0, 128], sizes = [1, 128], strides = [1, 1]} : vector<1x384xf32> to vector<1x128xf32>
    %211 = vector.extract_strided_slice %204 {offsets = [0, 256], sizes = [1, 128], strides = [1, 1]} : vector<1x384xf32> to vector<1x128xf32>
    %212 = arith.addf %206, %209 : vector<1x128xf32>
    %213 = arith.negf %212 : vector<1x128xf32>
    %214 = math.exp %213 : vector<1x128xf32>
    %cst_93 = arith.constant 1.000000e+00 : f32
    %215 = vector.broadcast %cst_93 : f32 to vector<1x128xf32>
    %216 = arith.addf %215, %214 : vector<1x128xf32>
    %217 = arith.divf %215, %216 : vector<1x128xf32>
    %218 = arith.addf %207, %210 : vector<1x128xf32>
    %219 = arith.negf %218 : vector<1x128xf32>
    %220 = math.exp %219 : vector<1x128xf32>
    %cst_94 = arith.constant 1.000000e+00 : f32
    %221 = vector.broadcast %cst_94 : f32 to vector<1x128xf32>
    %222 = arith.addf %221, %220 : vector<1x128xf32>
    %223 = arith.divf %221, %222 : vector<1x128xf32>
    %224 = arith.mulf %217, %211 : vector<1x128xf32>
    %225 = arith.addf %208, %224 : vector<1x128xf32>
    %226 = math.tanh %225 : vector<1x128xf32>
    %cst_95 = arith.constant 1.000000e+00 : f32
    %227 = vector.broadcast %cst_95 : f32 to vector<1x128xf32>
    %228 = arith.subf %227, %223 : vector<1x128xf32>
    %229 = arith.mulf %228, %226 : vector<1x128xf32>
    %230 = arith.mulf %223, %201 : vector<1x128xf32>
    %231 = arith.addf %229, %230 : vector<1x128xf32>
    %232 = arith.truncf %231 : vector<1x128xf32> to vector<1x128xbf16>
    %cst_96 = arith.constant dense<0.000000e+00> : vector<1x384xf32>
    %233 = tpu.matmul %232, %41, %cst_96 {dimension_numbers = #tpu.dot_dimension_numbers<[1], [0], [0], [1], [0, 0, 1, 1], [], []>} : vector<1x128xbf16>, vector<128x384xbf16>, vector<1x384xf32> -> vector<1x384xf32>
    %234 = arith.addf %233, %43 : vector<1x384xf32>
    %235 = vector.extract_strided_slice %84 {offsets = [5, 0], sizes = [1, 384], strides = [1, 1]} : vector<8x384xf32> to vector<1x384xf32>
    %236 = vector.extract_strided_slice %235 {offsets = [0, 0], sizes = [1, 128], strides = [1, 1]} : vector<1x384xf32> to vector<1x128xf32>
    %237 = vector.extract_strided_slice %235 {offsets = [0, 128], sizes = [1, 128], strides = [1, 1]} : vector<1x384xf32> to vector<1x128xf32>
    %238 = vector.extract_strided_slice %235 {offsets = [0, 256], sizes = [1, 128], strides = [1, 1]} : vector<1x384xf32> to vector<1x128xf32>
    %239 = vector.extract_strided_slice %234 {offsets = [0, 0], sizes = [1, 128], strides = [1, 1]} : vector<1x384xf32> to vector<1x128xf32>
    %240 = vector.extract_strided_slice %234 {offsets = [0, 128], sizes = [1, 128], strides = [1, 1]} : vector<1x384xf32> to vector<1x128xf32>
    %241 = vector.extract_strided_slice %234 {offsets = [0, 256], sizes = [1, 128], strides = [1, 1]} : vector<1x384xf32> to vector<1x128xf32>
    %242 = arith.addf %236, %239 : vector<1x128xf32>
    %243 = arith.negf %242 : vector<1x128xf32>
    %244 = math.exp %243 : vector<1x128xf32>
    %cst_97 = arith.constant 1.000000e+00 : f32
    %245 = vector.broadcast %cst_97 : f32 to vector<1x128xf32>
    %246 = arith.addf %245, %244 : vector<1x128xf32>
    %247 = arith.divf %245, %246 : vector<1x128xf32>
    %248 = arith.addf %237, %240 : vector<1x128xf32>
    %249 = arith.negf %248 : vector<1x128xf32>
    %250 = math.exp %249 : vector<1x128xf32>
    %cst_98 = arith.constant 1.000000e+00 : f32
    %251 = vector.broadcast %cst_98 : f32 to vector<1x128xf32>
    %252 = arith.addf %251, %250 : vector<1x128xf32>
    %253 = arith.divf %251, %252 : vector<1x128xf32>
    %254 = arith.mulf %247, %241 : vector<1x128xf32>
    %255 = arith.addf %238, %254 : vector<1x128xf32>
    %256 = math.tanh %255 : vector<1x128xf32>
    %cst_99 = arith.constant 1.000000e+00 : f32
    %257 = vector.broadcast %cst_99 : f32 to vector<1x128xf32>
    %258 = arith.subf %257, %253 : vector<1x128xf32>
    %259 = arith.mulf %258, %256 : vector<1x128xf32>
    %260 = arith.mulf %253, %231 : vector<1x128xf32>
    %261 = arith.addf %259, %260 : vector<1x128xf32>
    %262 = arith.truncf %261 : vector<1x128xf32> to vector<1x128xbf16>
    %cst_100 = arith.constant dense<0.000000e+00> : vector<1x384xf32>
    %263 = tpu.matmul %262, %41, %cst_100 {dimension_numbers = #tpu.dot_dimension_numbers<[1], [0], [0], [1], [0, 0, 1, 1], [], []>} : vector<1x128xbf16>, vector<128x384xbf16>, vector<1x384xf32> -> vector<1x384xf32>
    %264 = arith.addf %263, %43 : vector<1x384xf32>
    %265 = vector.extract_strided_slice %84 {offsets = [6, 0], sizes = [1, 384], strides = [1, 1]} : vector<8x384xf32> to vector<1x384xf32>
    %266 = vector.extract_strided_slice %265 {offsets = [0, 0], sizes = [1, 128], strides = [1, 1]} : vector<1x384xf32> to vector<1x128xf32>
    %267 = vector.extract_strided_slice %265 {offsets = [0, 128], sizes = [1, 128], strides = [1, 1]} : vector<1x384xf32> to vector<1x128xf32>
    %268 = vector.extract_strided_slice %265 {offsets = [0, 256], sizes = [1, 128], strides = [1, 1]} : vector<1x384xf32> to vector<1x128xf32>
    %269 = vector.extract_strided_slice %264 {offsets = [0, 0], sizes = [1, 128], strides = [1, 1]} : vector<1x384xf32> to vector<1x128xf32>
    %270 = vector.extract_strided_slice %264 {offsets = [0, 128], sizes = [1, 128], strides = [1, 1]} : vector<1x384xf32> to vector<1x128xf32>
    %271 = vector.extract_strided_slice %264 {offsets = [0, 256], sizes = [1, 128], strides = [1, 1]} : vector<1x384xf32> to vector<1x128xf32>
    %272 = arith.addf %266, %269 : vector<1x128xf32>
    %273 = arith.negf %272 : vector<1x128xf32>
    %274 = math.exp %273 : vector<1x128xf32>
    %cst_101 = arith.constant 1.000000e+00 : f32
    %275 = vector.broadcast %cst_101 : f32 to vector<1x128xf32>
    %276 = arith.addf %275, %274 : vector<1x128xf32>
    %277 = arith.divf %275, %276 : vector<1x128xf32>
    %278 = arith.addf %267, %270 : vector<1x128xf32>
    %279 = arith.negf %278 : vector<1x128xf32>
    %280 = math.exp %279 : vector<1x128xf32>
    %cst_102 = arith.constant 1.000000e+00 : f32
    %281 = vector.broadcast %cst_102 : f32 to vector<1x128xf32>
    %282 = arith.addf %281, %280 : vector<1x128xf32>
    %283 = arith.divf %281, %282 : vector<1x128xf32>
    %284 = arith.mulf %277, %271 : vector<1x128xf32>
    %285 = arith.addf %268, %284 : vector<1x128xf32>
    %286 = math.tanh %285 : vector<1x128xf32>
    %cst_103 = arith.constant 1.000000e+00 : f32
    %287 = vector.broadcast %cst_103 : f32 to vector<1x128xf32>
    %288 = arith.subf %287, %283 : vector<1x128xf32>
    %289 = arith.mulf %288, %286 : vector<1x128xf32>
    %290 = arith.mulf %283, %261 : vector<1x128xf32>
    %291 = arith.addf %289, %290 : vector<1x128xf32>
    %292 = arith.truncf %291 : vector<1x128xf32> to vector<1x128xbf16>
    %cst_104 = arith.constant dense<0.000000e+00> : vector<1x384xf32>
    %293 = tpu.matmul %292, %41, %cst_104 {dimension_numbers = #tpu.dot_dimension_numbers<[1], [0], [0], [1], [0, 0, 1, 1], [], []>} : vector<1x128xbf16>, vector<128x384xbf16>, vector<1x384xf32> -> vector<1x384xf32>
    %294 = arith.addf %293, %43 : vector<1x384xf32>
    %295 = vector.extract_strided_slice %84 {offsets = [7, 0], sizes = [1, 384], strides = [1, 1]} : vector<8x384xf32> to vector<1x384xf32>
    %296 = vector.extract_strided_slice %295 {offsets = [0, 0], sizes = [1, 128], strides = [1, 1]} : vector<1x384xf32> to vector<1x128xf32>
    %297 = vector.extract_strided_slice %295 {offsets = [0, 128], sizes = [1, 128], strides = [1, 1]} : vector<1x384xf32> to vector<1x128xf32>
    %298 = vector.extract_strided_slice %295 {offsets = [0, 256], sizes = [1, 128], strides = [1, 1]} : vector<1x384xf32> to vector<1x128xf32>
    %299 = vector.extract_strided_slice %294 {offsets = [0, 0], sizes = [1, 128], strides = [1, 1]} : vector<1x384xf32> to vector<1x128xf32>
    %300 = vector.extract_strided_slice %294 {offsets = [0, 128], sizes = [1, 128], strides = [1, 1]} : vector<1x384xf32> to vector<1x128xf32>
    %301 = vector.extract_strided_slice %294 {offsets = [0, 256], sizes = [1, 128], strides = [1, 1]} : vector<1x384xf32> to vector<1x128xf32>
    %302 = arith.addf %296, %299 : vector<1x128xf32>
    %303 = arith.negf %302 : vector<1x128xf32>
    %304 = math.exp %303 : vector<1x128xf32>
    %cst_105 = arith.constant 1.000000e+00 : f32
    %305 = vector.broadcast %cst_105 : f32 to vector<1x128xf32>
    %306 = arith.addf %305, %304 : vector<1x128xf32>
    %307 = arith.divf %305, %306 : vector<1x128xf32>
    %308 = arith.addf %297, %300 : vector<1x128xf32>
    %309 = arith.negf %308 : vector<1x128xf32>
    %310 = math.exp %309 : vector<1x128xf32>
    %cst_106 = arith.constant 1.000000e+00 : f32
    %311 = vector.broadcast %cst_106 : f32 to vector<1x128xf32>
    %312 = arith.addf %311, %310 : vector<1x128xf32>
    %313 = arith.divf %311, %312 : vector<1x128xf32>
    %314 = arith.mulf %307, %301 : vector<1x128xf32>
    %315 = arith.addf %298, %314 : vector<1x128xf32>
    %316 = math.tanh %315 : vector<1x128xf32>
    %cst_107 = arith.constant 1.000000e+00 : f32
    %317 = vector.broadcast %cst_107 : f32 to vector<1x128xf32>
    %318 = arith.subf %317, %313 : vector<1x128xf32>
    %319 = arith.mulf %318, %316 : vector<1x128xf32>
    %320 = arith.mulf %313, %291 : vector<1x128xf32>
    %321 = arith.addf %319, %320 : vector<1x128xf32>
    %322 = tpu.concatenate %111, %141, %171, %201, %231, %261, %291, %321 in 0 : vector<1x128xf32>, vector<1x128xf32>, vector<1x128xf32>, vector<1x128xf32>, vector<1x128xf32>, vector<1x128xf32>, vector<1x128xf32>, vector<1x128xf32> -> vector<8x128xf32>
    %c0_108 = arith.constant 0 : index
    %c0_109 = arith.constant 0 : index
    %323 = vector.load %arg7[%c0_108, %c0_109] : memref<8x128xf32, #tpu.memory_space<vmem>>, vector<8x128xf32>
    tpu.vector_store %arg7[%c0_108, %c0_109], %322 {strides = array<i32>} : memref<8x128xf32, #tpu.memory_space<vmem>>, vector<8x128xf32>,
    %c0_110 = arith.constant 0 : index
    %c0_111 = arith.constant 0 : index
    %324 = vector.load %arg8[%c0_110, %c0_111] : memref<1x128xf32, #tpu.memory_space<vmem>>, vector<1x128xf32>
    tpu.vector_store %arg8[%c0_110, %c0_111], %321 {strides = array<i32>} : memref<1x128xf32, #tpu.memory_space<vmem>>, vector<1x128xf32>,
    return
  }
}

</mosaic_0001>

<llo_original>
// kernel: encoder_rnn_forward.1
$region0: #{encoder_rnn_forward.1}
  #allocation0 [shape = 'u32[]', space=smem, size = 0x4, offset = 0x4, fixed_abs, tag = 'smem constant byte address 0x4 - core index']
  #allocation1 [shape = 'u32[144,128]{1,0:T(1,128)}', space=vmem, size = 0x12000, scoped, tag = 'internal scratch']
  #allocation2 [shape = 'f32[8,128]{1,0:T(8,128)}', space=vmem, size = 0x1000, scoped, tag = 'scratch operand']
  #allocation3 [shape = 's32[8]{0}', space=sflag, size = 0x20, scoped, tag = 'scratch operand']
  #allocation12 [shape = 's32[]', space=sflag, size = 0x4, offset = 0, fixed_abs, tag = 'sflag constant byte address 0x0 - dummy sync flag']
  #allocation13 [shape = 's32[]', space=sflag, size = 0x4, offset = 0, fixed_abs, tag = 'sflag constant byte address 0x0 - dummy sync flag']
  #allocation14 [shape = 's32[]', space=sflag, size = 0x4, offset = 0, fixed_abs, tag = 'sflag constant byte address 0x0 - dummy sync flag']
  #allocation15 [shape = 's32[]', space=sflag, size = 0x4, offset = 0, fixed_abs, tag = 'sflag constant byte address 0x0 - dummy sync flag']
  #allocation16 [shape = 's32[]', space=sflag, size = 0x4, offset = 0, fixed_abs, tag = 'sflag constant byte address 0x0 - dummy sync flag']
  #allocation17 [shape = 's32[]', space=sflag, size = 0x4, offset = 0, fixed_abs, tag = 'sflag constant byte address 0x0 - dummy sync flag']
  #allocation18 [shape = 's32[]', space=sflag, size = 0x4, offset = 0, fixed_abs, tag = 'sflag constant byte address 0x0 - dummy sync flag']
  #allocation19 [shape = 's32[]', space=sflag, size = 0x4, offset = 0, fixed_abs, tag = 'sflag constant byte address 0x0 - dummy sync flag']
  %s0 = inlined_call_operand.vmem [shape: s32[8], index: 0, kind: input, shape index: {}]
  %s1 = inlined_call_operand.vmem [shape: f32[16,128], index: 1, kind: input, shape index: {}]
  %s2 = inlined_call_operand.hbm [shape: bf16[128,384], index: 2, kind: input, shape index: {}]
  %s3 = inlined_call_operand.hbm [shape: bf16[128,384], index: 3, kind: input, shape index: {}]
  %s4 = inlined_call_operand.vmem [shape: f32[1,384], index: 4, kind: input, shape index: {}]
  %s5 = inlined_call_operand.vmem [shape: f32[1,384], index: 5, kind: input, shape index: {}]
  %s6 = inlined_call_operand.vmem [shape: f32[1,128], index: 6, kind: input, shape index: {}]
  %s7 = inlined_call_operand.hbm [shape: f32[8,128], index: 7, kind: output, shape index: {0}]
  %s8 = inlined_call_operand.vmem [shape: f32[1,128], index: 8, kind: output, shape index: {1}]
  %9 = xla_tuple %s7, %s8
  %s10 = sld [smem:[#allocation0]]
  $region294: #{encoder_rnn_forward.1} parent=0
    _
  %s12 = ssub.s32 1, %s10
  %s13 = scalar_select 0, %s12, %s10
  $region1: #{encoder_rnn_forward.1} parent=0
    #allocation4 [shape = 'u8[512]{0}', space=smem, size = 0x200, scoped, tag = 'input window, operand 0, single buffered']
    #allocation5 [shape = 's32[1]{0}', space=sflag, size = 0x4, scoped, tag = 'scoped memory for encoder_rnn_forward.1']
    #allocation6 [shape = 's32[1]{0}', space=sflag, size = 0x4, scoped, tag = 'scoped memory for encoder_rnn_forward.1']
    #allocation7 [shape = 's32[1]{0}', space=sflag, size = 0x4, scoped, tag = 'scoped memory for encoder_rnn_forward.1']
    #allocation8 [shape = 'u8[98304]{0}', space=vmem, size = 0x18000, scoped, tag = 'input window, operand 2, single buffered']
    #allocation9 [shape = 'u8[98304]{0}', space=vmem, size = 0x18000, scoped, tag = 'input window, operand 3, single buffered']
    #allocation10 [shape = 's32[1]{0}', space=sflag, size = 0x4, scoped, tag = 'scoped memory for encoder_rnn_forward.1']
    #allocation11 [shape = 'u8[4096]{0}', space=vmem, size = 0x1000, scoped, tag = 'output window, operand 0, single buffered']
    %14 = vsyncpa [#allocation7], 0
    %15 = vsyncpa [#allocation5], 0
    %16 = vsyncpa [#allocation10], 0
    %17 = vsyncpa [#allocation6], 0
    // Predicated region
    $region2: #{encoder_rnn_forward.1} parent=1 // pred_check
      _
    $region3: #{encoder_rnn_forward.1} parent=1 // pred_check_branch
      %19 = sbr.rel (0) target = $region5
    $region4: #{encoder_rnn_forward.1} parent=1 // pred_region
      %s21 = ssub.s32 16, 16
      %22 = vsyncadd [#allocation7], %s21
      %s24 = sshll.u32 %s0, 4
      %s25 = int_to_ptr.vmem [resolvable:$true] %s24
      %27 = dma.vmem_to_smem %s25, 16, [#allocation4], [#allocation7]
    $region5: #{encoder_rnn_forward.1} parent=1 // pred_fallthru
      _
    // Predicated region
    $region6: #{encoder_rnn_forward.1} parent=1 // pred_check
      _
    $region7: #{encoder_rnn_forward.1} parent=1 // pred_check_branch
      %29 = sbr.rel (0) target = $region9
    $region8: #{encoder_rnn_forward.1} parent=1 // pred_region
      %s31 = ssub.s32 3072, 3072
      %32 = vsyncadd [#allocation5], %s31
      %s33 = sshll.u32 [#allocation8], 4
      %s34 = int_to_ptr.vmem [resolvable:$true] %s33
      %39 = dma.hbm_to_vmem [thread:$0]  %s2, 3072, %s34, [#allocation5], 192, 192, 12
    $region9: #{encoder_rnn_forward.1} parent=1 // pred_fallthru
      _
    // Predicated region
    $region10: #{encoder_rnn_forward.1} parent=1 // pred_check
      _
    $region11: #{encoder_rnn_forward.1} parent=1 // pred_check_branch
      %41 = sbr.rel (0) target = $region13
    $region12: #{encoder_rnn_forward.1} parent=1 // pred_region
      %s43 = ssub.s32 3072, 3072
      %44 = vsyncadd [#allocation10], %s43
      %s45 = sshll.u32 [#allocation9], 4
      %s46 = int_to_ptr.vmem [resolvable:$true] %s45
      %51 = dma.hbm_to_vmem [thread:$0]  %s3, 3072, %s46, [#allocation10], 192, 192, 12
    $region13: #{encoder_rnn_forward.1} parent=1 // pred_fallthru
      _
    // Predicated region
    $region14: #{encoder_rnn_forward.1} parent=1 // pred_check
      _
    $region15: #{encoder_rnn_forward.1} parent=1 // pred_check_branch
      %53 = sbr.rel (0) target = $region17
    $region16: #{encoder_rnn_forward.1} parent=1 // pred_region
      _
    $region17: #{encoder_rnn_forward.1} parent=1 // pred_fallthru
      _
    // Predicated region
    $region18: #{encoder_rnn_forward.1} parent=1 // pred_check
      _
    $region19: #{encoder_rnn_forward.1} parent=1 // pred_check_branch
      %55 = sbr.rel (0) target = $region21
    $region20: #{encoder_rnn_forward.1} parent=1 // pred_region
      _
    $region21: #{encoder_rnn_forward.1} parent=1 // pred_fallthru
      _
    // Predicated region
    $region22: #{encoder_rnn_forward.1} parent=1 // pred_check
      _
    $region23: #{encoder_rnn_forward.1} parent=1 // pred_check_branch
      %57 = sbr.rel (0) target = $region25
    $region24: #{encoder_rnn_forward.1} parent=1 // pred_region
      _
    $region25: #{encoder_rnn_forward.1} parent=1 // pred_fallthru
      _
    // Predicated region
    $region26: #{encoder_rnn_forward.1} parent=1 // pred_check
      _
    $region27: #{encoder_rnn_forward.1} parent=1 // pred_check_branch
      %59 = sbr.rel (0) target = $region29
    $region28: #{encoder_rnn_forward.1} parent=1 // pred_region
      %60 = dma.done [#allocation7], 16
    $region29: #{encoder_rnn_forward.1} parent=1 // pred_fallthru
      _
    // Predicated region
    $region30: #{encoder_rnn_forward.1} parent=1 // pred_check
      _
    $region31: #{encoder_rnn_forward.1} parent=1 // pred_check_branch
      %62 = sbr.rel (0) target = $region33
    $region32: #{encoder_rnn_forward.1} parent=1 // pred_region
      %63 = dma.done [#allocation5], 3072
    $region33: #{encoder_rnn_forward.1} parent=1 // pred_fallthru
      _
    // Predicated region
    $region34: #{encoder_rnn_forward.1} parent=1 // pred_check
      _
    $region35: #{encoder_rnn_forward.1} parent=1 // pred_check_branch
      %65 = sbr.rel (0) target = $region37
    $region36: #{encoder_rnn_forward.1} parent=1 // pred_region
      %66 = dma.done [#allocation10], 3072
    $region37: #{encoder_rnn_forward.1} parent=1 // pred_fallthru
      _
    %67 = sfence
    %s69 = sld [smem:[#allocation4]]
    %s70 = scalar_lea.vmem %s1, %s69
    %p72 = scmp.lt.u32.totalorder 1, 8
    %p73 = pneg %p72
    // Predicated region
    $region38: #{encoder_rnn_forward.1} parent=1 // pred_check
      _
    $region39: #{encoder_rnn_forward.1} parent=1 // pred_check_branch
      %75 = sbr.rel (%p72) target = $region41
    $region40: #{encoder_rnn_forward.1} parent=1 // pred_region
      %s90 = sand.u32 1, 7
      %p91 = scmp.eq.s32.totalorder %s90, 0
      %p92 = pneg %p91
      // Predicated region
      $region53: #{encoder_rnn_forward.1} parent=40 // pred_check
        _
      $region54: #{encoder_rnn_forward.1} parent=40 // pred_check_branch
        %94 = sbr.rel (%p91) target = $region56
      $region55: #{encoder_rnn_forward.1} parent=40 // pred_region
        %s95 = sand.u32 1, 7
        %s96 = ssub.s32 1, %s95
        %s97 = scalar_lea.vmem %s70, %s96
        %s98 = ssub.s32 1, %s95
        %s99 = scalar_lea.vmem [#allocation2], %s98
        %s100 = sshllo.u32 0, %s95
        loop: start=0, step=1, limit=1
        $region57: #{encoder_rnn_forward.1} parent=55 // loop_pre_header
          _
        $region58: #{encoder_rnn_forward.1} parent=55 // loop_header
          %s102 = sphi 0, %s106
          %p103 = scmp.ge.s32.totalorder %s102, 1
          %s107 = sphi %s97, %s97
          %s108 = sphi %s99, %s99
        $region59: #{encoder_rnn_forward.1} parent=55 // loop_header_branch
          %105 = sbr.rel (%p103) target = $region63
        $region60: #{encoder_rnn_forward.1} parent=55 // loop_body
          %v109 = vld [vmem:[%s107] sm:%s100]
          %110 = vst [vmem:[%s108] sm:%s100] %v109
        $region61: #{encoder_rnn_forward.1} parent=55 // loop_footer
          %s106 = sadd.s32 1, %s102
        $region62: #{encoder_rnn_forward.1} parent=55 // loop_footer_branch
          %101 = sbr.rel target = $region58
        $region63: #{encoder_rnn_forward.1} parent=55 // loop_exit
          _
      $region56: #{encoder_rnn_forward.1} parent=40 // pred_fallthru
        _
    $region41: #{encoder_rnn_forward.1} parent=1 // pred_fallthru
      _
    // Predicated region
    $region42: #{encoder_rnn_forward.1} parent=1 // pred_check
      %p76 = pneg %p72
    $region43: #{encoder_rnn_forward.1} parent=1 // pred_check_branch
      %78 = sbr.rel (%p76) target = $region45
    $region44: #{encoder_rnn_forward.1} parent=1 // pred_region
      %s79 = sshllo.u32 0, 1
      loop: start=0, step=1, limit=1
      $region46: #{encoder_rnn_forward.1} parent=44 // loop_pre_header
        _
      $region47: #{encoder_rnn_forward.1} parent=44 // loop_header
        %s81 = sphi 0, %s85
        %p82 = scmp.ge.s32.totalorder %s81, 1
        %s86 = sphi %s70, %s70
        %s87 = sphi [#allocation2], [#allocation2]
      $region48: #{encoder_rnn_forward.1} parent=44 // loop_header_branch
        %84 = sbr.rel (%p82) target = $region52
      $region49: #{encoder_rnn_forward.1} parent=44 // loop_body
        %v88 = vld [vmem:[%s86] sm:%s79]
        %89 = vst [vmem:[%s87] sm:%s79] %v88
      $region50: #{encoder_rnn_forward.1} parent=44 // loop_footer
        %s85 = sadd.s32 1, %s81
      $region51: #{encoder_rnn_forward.1} parent=44 // loop_footer_branch
        %80 = sbr.rel target = $region47
      $region52: #{encoder_rnn_forward.1} parent=44 // loop_exit
        _
    $region45: #{encoder_rnn_forward.1} parent=1 // pred_fallthru
      _
    // Predicated region
    $region64: #{encoder_rnn_forward.1} parent=1 // pred_check
      _
    $region65: #{encoder_rnn_forward.1} parent=1 // pred_check_branch
      %113 = sbr.rel (0) target = $region67
    $region66: #{encoder_rnn_forward.1} parent=1 // pred_region
      %114 = vsyncadd [#allocation3], 16
    $region67: #{encoder_rnn_forward.1} parent=1 // pred_fallthru
      _
    %s115 = sld [smem:[#allocation4 + $0x1]]
    %s116 = scalar_lea.vmem %s1, %s115
    %s117 = scalar_lea.vmem [#allocation2], 1
    %s118 = scalar_lea.sflag [#allocation3], 1
    %p120 = scmp.lt.u32.totalorder 1, 8
    %p121 = pneg %p120
    // Predicated region
    $region68: #{encoder_rnn_forward.1} parent=1 // pred_check
      _
    $region69: #{encoder_rnn_forward.1} parent=1 // pred_check_branch
      %123 = sbr.rel (%p120) target = $region71
    $region70: #{encoder_rnn_forward.1} parent=1 // pred_region
      %s138 = sand.u32 1, 7
      %p139 = scmp.eq.s32.totalorder %s138, 0
      %p140 = pneg %p139
      // Predicated region
      $region83: #{encoder_rnn_forward.1} parent=70 // pred_check
        _
      $region84: #{encoder_rnn_forward.1} parent=70 // pred_check_branch
        %142 = sbr.rel (%p139) target = $region86
      $region85: #{encoder_rnn_forward.1} parent=70 // pred_region
        %s143 = sand.u32 1, 7
        %s144 = ssub.s32 1, %s143
        %s145 = scalar_lea.vmem %s116, %s144
        %s146 = ssub.s32 1, %s143
        %s147 = scalar_lea.vmem %s117, %s146 [#allocation2]
        %s148 = sshllo.u32 0, %s143
        loop: start=0, step=1, limit=1
        $region87: #{encoder_rnn_forward.1} parent=85 // loop_pre_header
          _
        $region88: #{encoder_rnn_forward.1} parent=85 // loop_header
          %s150 = sphi 0, %s154
          %p151 = scmp.ge.s32.totalorder %s150, 1
          %s155 = sphi %s145, %s145
          %s156 = sphi %s147, %s147
        $region89: #{encoder_rnn_forward.1} parent=85 // loop_header_branch
          %153 = sbr.rel (%p151) target = $region93
        $region90: #{encoder_rnn_forward.1} parent=85 // loop_body
          %v157 = vld [vmem:[%s155] sm:%s148]
          %158 = vst [vmem:[%s156] sm:%s148] %v157
        $region91: #{encoder_rnn_forward.1} parent=85 // loop_footer
          %s154 = sadd.s32 1, %s150
        $region92: #{encoder_rnn_forward.1} parent=85 // loop_footer_branch
          %149 = sbr.rel target = $region88
        $region93: #{encoder_rnn_forward.1} parent=85 // loop_exit
          _
      $region86: #{encoder_rnn_forward.1} parent=70 // pred_fallthru
        _
    $region71: #{encoder_rnn_forward.1} parent=1 // pred_fallthru
      _
    // Predicated region
    $region72: #{encoder_rnn_forward.1} parent=1 // pred_check
      %p124 = pneg %p120
    $region73: #{encoder_rnn_forward.1} parent=1 // pred_check_branch
      %126 = sbr.rel (%p124) target = $region75
    $region74: #{encoder_rnn_forward.1} parent=1 // pred_region
      %s127 = sshllo.u32 0, 1
      loop: start=0, step=1, limit=1
      $region76: #{encoder_rnn_forward.1} parent=74 // loop_pre_header
        _
      $region77: #{encoder_rnn_forward.1} parent=74 // loop_header
        %s129 = sphi 0, %s133
        %p130 = scmp.ge.s32.totalorder %s129, 1
        %s134 = sphi %s116, %s116
        %s135 = sphi %s117, %s117
      $region78: #{encoder_rnn_forward.1} parent=74 // loop_header_branch
        %132 = sbr.rel (%p130) target = $region82
      $region79: #{encoder_rnn_forward.1} parent=74 // loop_body
        %v136 = vld [vmem:[%s134] sm:%s127]
        %137 = vst [vmem:[%s135] sm:%s127] %v136
      $region80: #{encoder_rnn_forward.1} parent=74 // loop_footer
        %s133 = sadd.s32 1, %s129
      $region81: #{encoder_rnn_forward.1} parent=74 // loop_footer_branch
        %128 = sbr.rel target = $region77
      $region82: #{encoder_rnn_forward.1} parent=74 // loop_exit
        _
    $region75: #{encoder_rnn_forward.1} parent=1 // pred_fallthru
      _
    // Predicated region
    $region94: #{encoder_rnn_forward.1} parent=1 // pred_check
      _
    $region95: #{encoder_rnn_forward.1} parent=1 // pred_check_branch
      %161 = sbr.rel (0) target = $region97
    $region96: #{encoder_rnn_forward.1} parent=1 // pred_region
      %162 = vsyncadd %s118, 16
    $region97: #{encoder_rnn_forward.1} parent=1 // pred_fallthru
      _
    %s163 = sld [smem:[#allocation4 + $0x2]]
    %s164 = scalar_lea.vmem %s1, %s163
    %s165 = scalar_lea.vmem [#allocation2], 2
    %s166 = scalar_lea.sflag [#allocation3], 2
    %p168 = scmp.lt.u32.totalorder 1, 8
    %p169 = pneg %p168
    // Predicated region
    $region98: #{encoder_rnn_forward.1} parent=1 // pred_check
      _
    $region99: #{encoder_rnn_forward.1} parent=1 // pred_check_branch
      %171 = sbr.rel (%p168) target = $region101
    $region100: #{encoder_rnn_forward.1} parent=1 // pred_region
      %s186 = sand.u32 1, 7
      %p187 = scmp.eq.s32.totalorder %s186, 0
      %p188 = pneg %p187
      // Predicated region
      $region113: #{encoder_rnn_forward.1} parent=100 // pred_check
        _
      $region114: #{encoder_rnn_forward.1} parent=100 // pred_check_branch
        %190 = sbr.rel (%p187) target = $region116
      $region115: #{encoder_rnn_forward.1} parent=100 // pred_region
        %s191 = sand.u32 1, 7
        %s192 = ssub.s32 1, %s191
        %s193 = scalar_lea.vmem %s164, %s192
        %s194 = ssub.s32 1, %s191
        %s195 = scalar_lea.vmem %s165, %s194 [#allocation2]
        %s196 = sshllo.u32 0, %s191
        loop: start=0, step=1, limit=1
        $region117: #{encoder_rnn_forward.1} parent=115 // loop_pre_header
          _
        $region118: #{encoder_rnn_forward.1} parent=115 // loop_header
          %s198 = sphi 0, %s202
          %p199 = scmp.ge.s32.totalorder %s198, 1
          %s203 = sphi %s193, %s193
          %s204 = sphi %s195, %s195
        $region119: #{encoder_rnn_forward.1} parent=115 // loop_header_branch
          %201 = sbr.rel (%p199) target = $region123
        $region120: #{encoder_rnn_forward.1} parent=115 // loop_body
          %v205 = vld [vmem:[%s203] sm:%s196]
          %206 = vst [vmem:[%s204] sm:%s196] %v205
        $region121: #{encoder_rnn_forward.1} parent=115 // loop_footer
          %s202 = sadd.s32 1, %s198
        $region122: #{encoder_rnn_forward.1} parent=115 // loop_footer_branch
          %197 = sbr.rel target = $region118
        $region123: #{encoder_rnn_forward.1} parent=115 // loop_exit
          _
      $region116: #{encoder_rnn_forward.1} parent=100 // pred_fallthru
        _
    $region101: #{encoder_rnn_forward.1} parent=1 // pred_fallthru
      _
    // Predicated region
    $region102: #{encoder_rnn_forward.1} parent=1 // pred_check
      %p172 = pneg %p168
    $region103: #{encoder_rnn_forward.1} parent=1 // pred_check_branch
      %174 = sbr.rel (%p172) target = $region105
    $region104: #{encoder_rnn_forward.1} parent=1 // pred_region
      %s175 = sshllo.u32 0, 1
      loop: start=0, step=1, limit=1
      $region106: #{encoder_rnn_forward.1} parent=104 // loop_pre_header
        _
      $region107: #{encoder_rnn_forward.1} parent=104 // loop_header
        %s177 = sphi 0, %s181
        %p178 = scmp.ge.s32.totalorder %s177, 1
        %s182 = sphi %s164, %s164
        %s183 = sphi %s165, %s165
      $region108: #{encoder_rnn_forward.1} parent=104 // loop_header_branch
        %180 = sbr.rel (%p178) target = $region112
      $region109: #{encoder_rnn_forward.1} parent=104 // loop_body
        %v184 = vld [vmem:[%s182] sm:%s175]
        %185 = vst [vmem:[%s183] sm:%s175] %v184
      $region110: #{encoder_rnn_forward.1} parent=104 // loop_footer
        %s181 = sadd.s32 1, %s177
      $region111: #{encoder_rnn_forward.1} parent=104 // loop_footer_branch
        %176 = sbr.rel target = $region107
      $region112: #{encoder_rnn_forward.1} parent=104 // loop_exit
        _
    $region105: #{encoder_rnn_forward.1} parent=1 // pred_fallthru
      _
    // Predicated region
    $region124: #{encoder_rnn_forward.1} parent=1 // pred_check
      _
    $region125: #{encoder_rnn_forward.1} parent=1 // pred_check_branch
      %209 = sbr.rel (0) target = $region127
    $region126: #{encoder_rnn_forward.1} parent=1 // pred_region
      %210 = vsyncadd %s166, 16
    $region127: #{encoder_rnn_forward.1} parent=1 // pred_fallthru
      _
    %s211 = sld [smem:[#allocation4 + $0x3]]
    %s212 = scalar_lea.vmem %s1, %s211
    %s213 = scalar_lea.vmem [#allocation2], 3
    %s214 = scalar_lea.sflag [#allocation3], 3
    %p216 = scmp.lt.u32.totalorder 1, 8
    %p217 = pneg %p216
    // Predicated region
    $region128: #{encoder_rnn_forward.1} parent=1 // pred_check
      _
    $region129: #{encoder_rnn_forward.1} parent=1 // pred_check_branch
      %219 = sbr.rel (%p216) target = $region131
    $region130: #{encoder_rnn_forward.1} parent=1 // pred_region
      %s234 = sand.u32 1, 7
      %p235 = scmp.eq.s32.totalorder %s234, 0
      %p236 = pneg %p235
      // Predicated region
      $region143: #{encoder_rnn_forward.1} parent=130 // pred_check
        _
      $region144: #{encoder_rnn_forward.1} parent=130 // pred_check_branch
        %238 = sbr.rel (%p235) target = $region146
      $region145: #{encoder_rnn_forward.1} parent=130 // pred_region
        %s239 = sand.u32 1, 7
        %s240 = ssub.s32 1, %s239
        %s241 = scalar_lea.vmem %s212, %s240
        %s242 = ssub.s32 1, %s239
        %s243 = scalar_lea.vmem %s213, %s242 [#allocation2]
        %s244 = sshllo.u32 0, %s239
        loop: start=0, step=1, limit=1
        $region147: #{encoder_rnn_forward.1} parent=145 // loop_pre_header
          _
        $region148: #{encoder_rnn_forward.1} parent=145 // loop_header
          %s246 = sphi 0, %s250
          %p247 = scmp.ge.s32.totalorder %s246, 1
          %s251 = sphi %s241, %s241
          %s252 = sphi %s243, %s243
        $region149: #{encoder_rnn_forward.1} parent=145 // loop_header_branch
          %249 = sbr.rel (%p247) target = $region153
        $region150: #{encoder_rnn_forward.1} parent=145 // loop_body
          %v253 = vld [vmem:[%s251] sm:%s244]
          %254 = vst [vmem:[%s252] sm:%s244] %v253
        $region151: #{encoder_rnn_forward.1} parent=145 // loop_footer
          %s250 = sadd.s32 1, %s246
        $region152: #{encoder_rnn_forward.1} parent=145 // loop_footer_branch
          %245 = sbr.rel target = $region148
        $region153: #{encoder_rnn_forward.1} parent=145 // loop_exit
          _
      $region146: #{encoder_rnn_forward.1} parent=130 // pred_fallthru
        _
    $region131: #{encoder_rnn_forward.1} parent=1 // pred_fallthru
      _
    // Predicated region
    $region132: #{encoder_rnn_forward.1} parent=1 // pred_check
      %p220 = pneg %p216
    $region133: #{encoder_rnn_forward.1} parent=1 // pred_check_branch
      %222 = sbr.rel (%p220) target = $region135
    $region134: #{encoder_rnn_forward.1} parent=1 // pred_region
      %s223 = sshllo.u32 0, 1
      loop: start=0, step=1, limit=1
      $region136: #{encoder_rnn_forward.1} parent=134 // loop_pre_header
        _
      $region137: #{encoder_rnn_forward.1} parent=134 // loop_header
        %s225 = sphi 0, %s229
        %p226 = scmp.ge.s32.totalorder %s225, 1
        %s230 = sphi %s212, %s212
        %s231 = sphi %s213, %s213
      $region138: #{encoder_rnn_forward.1} parent=134 // loop_header_branch
        %228 = sbr.rel (%p226) target = $region142
      $region139: #{encoder_rnn_forward.1} parent=134 // loop_body
        %v232 = vld [vmem:[%s230] sm:%s223]
        %233 = vst [vmem:[%s231] sm:%s223] %v232
      $region140: #{encoder_rnn_forward.1} parent=134 // loop_footer
        %s229 = sadd.s32 1, %s225
      $region141: #{encoder_rnn_forward.1} parent=134 // loop_footer_branch
        %224 = sbr.rel target = $region137
      $region142: #{encoder_rnn_forward.1} parent=134 // loop_exit
        _
    $region135: #{encoder_rnn_forward.1} parent=1 // pred_fallthru
      _
    // Predicated region
    $region154: #{encoder_rnn_forward.1} parent=1 // pred_check
      _
    $region155: #{encoder_rnn_forward.1} parent=1 // pred_check_branch
      %257 = sbr.rel (0) target = $region157
    $region156: #{encoder_rnn_forward.1} parent=1 // pred_region
      %258 = vsyncadd %s214, 16
    $region157: #{encoder_rnn_forward.1} parent=1 // pred_fallthru
      _
    %s259 = sld [smem:[#allocation4 + $0x4]]
    %s260 = scalar_lea.vmem %s1, %s259
    %s261 = scalar_lea.vmem [#allocation2], 4
    %s262 = scalar_lea.sflag [#allocation3], 4
    %p264 = scmp.lt.u32.totalorder 1, 8
    %p265 = pneg %p264
    // Predicated region
    $region158: #{encoder_rnn_forward.1} parent=1 // pred_check
      _
    $region159: #{encoder_rnn_forward.1} parent=1 // pred_check_branch
      %267 = sbr.rel (%p264) target = $region161
    $region160: #{encoder_rnn_forward.1} parent=1 // pred_region
      %s282 = sand.u32 1, 7
      %p283 = scmp.eq.s32.totalorder %s282, 0
      %p284 = pneg %p283
      // Predicated region
      $region173: #{encoder_rnn_forward.1} parent=160 // pred_check
        _
      $region174: #{encoder_rnn_forward.1} parent=160 // pred_check_branch
        %286 = sbr.rel (%p283) target = $region176
      $region175: #{encoder_rnn_forward.1} parent=160 // pred_region
        %s287 = sand.u32 1, 7
        %s288 = ssub.s32 1, %s287
        %s289 = scalar_lea.vmem %s260, %s288
        %s290 = ssub.s32 1, %s287
        %s291 = scalar_lea.vmem %s261, %s290 [#allocation2]
        %s292 = sshllo.u32 0, %s287
        loop: start=0, step=1, limit=1
        $region177: #{encoder_rnn_forward.1} parent=175 // loop_pre_header
          _
        $region178: #{encoder_rnn_forward.1} parent=175 // loop_header
          %s294 = sphi 0, %s298
          %p295 = scmp.ge.s32.totalorder %s294, 1
          %s299 = sphi %s289, %s289
          %s300 = sphi %s291, %s291
        $region179: #{encoder_rnn_forward.1} parent=175 // loop_header_branch
          %297 = sbr.rel (%p295) target = $region183
        $region180: #{encoder_rnn_forward.1} parent=175 // loop_body
          %v301 = vld [vmem:[%s299] sm:%s292]
          %302 = vst [vmem:[%s300] sm:%s292] %v301
        $region181: #{encoder_rnn_forward.1} parent=175 // loop_footer
          %s298 = sadd.s32 1, %s294
        $region182: #{encoder_rnn_forward.1} parent=175 // loop_footer_branch
          %293 = sbr.rel target = $region178
        $region183: #{encoder_rnn_forward.1} parent=175 // loop_exit
          _
      $region176: #{encoder_rnn_forward.1} parent=160 // pred_fallthru
        _
    $region161: #{encoder_rnn_forward.1} parent=1 // pred_fallthru
      _
    // Predicated region
    $region162: #{encoder_rnn_forward.1} parent=1 // pred_check
      %p268 = pneg %p264
    $region163: #{encoder_rnn_forward.1} parent=1 // pred_check_branch
      %270 = sbr.rel (%p268) target = $region165
    $region164: #{encoder_rnn_forward.1} parent=1 // pred_region
      %s271 = sshllo.u32 0, 1
      loop: start=0, step=1, limit=1
      $region166: #{encoder_rnn_forward.1} parent=164 // loop_pre_header
        _
      $region167: #{encoder_rnn_forward.1} parent=164 // loop_header
        %s273 = sphi 0, %s277
        %p274 = scmp.ge.s32.totalorder %s273, 1
        %s278 = sphi %s260, %s260
        %s279 = sphi %s261, %s261
      $region168: #{encoder_rnn_forward.1} parent=164 // loop_header_branch
        %276 = sbr.rel (%p274) target = $region172
      $region169: #{encoder_rnn_forward.1} parent=164 // loop_body
        %v280 = vld [vmem:[%s278] sm:%s271]
        %281 = vst [vmem:[%s279] sm:%s271] %v280
      $region170: #{encoder_rnn_forward.1} parent=164 // loop_footer
        %s277 = sadd.s32 1, %s273
      $region171: #{encoder_rnn_forward.1} parent=164 // loop_footer_branch
        %272 = sbr.rel target = $region167
      $region172: #{encoder_rnn_forward.1} parent=164 // loop_exit
        _
    $region165: #{encoder_rnn_forward.1} parent=1 // pred_fallthru
      _
    // Predicated region
    $region184: #{encoder_rnn_forward.1} parent=1 // pred_check
      _
    $region185: #{encoder_rnn_forward.1} parent=1 // pred_check_branch
      %305 = sbr.rel (0) target = $region187
    $region186: #{encoder_rnn_forward.1} parent=1 // pred_region
      %306 = vsyncadd %s262, 16
    $region187: #{encoder_rnn_forward.1} parent=1 // pred_fallthru
      _
    %s307 = sld [smem:[#allocation4 + $0x5]]
    %s308 = scalar_lea.vmem %s1, %s307
    %s309 = scalar_lea.vmem [#allocation2], 5
    %s310 = scalar_lea.sflag [#allocation3], 5
    %p312 = scmp.lt.u32.totalorder 1, 8
    %p313 = pneg %p312
    // Predicated region
    $region188: #{encoder_rnn_forward.1} parent=1 // pred_check
      _
    $region189: #{encoder_rnn_forward.1} parent=1 // pred_check_branch
      %315 = sbr.rel (%p312) target = $region191
    $region190: #{encoder_rnn_forward.1} parent=1 // pred_region
      %s330 = sand.u32 1, 7
      %p331 = scmp.eq.s32.totalorder %s330, 0
      %p332 = pneg %p331
      // Predicated region
      $region203: #{encoder_rnn_forward.1} parent=190 // pred_check
        _
      $region204: #{encoder_rnn_forward.1} parent=190 // pred_check_branch
        %334 = sbr.rel (%p331) target = $region206
      $region205: #{encoder_rnn_forward.1} parent=190 // pred_region
        %s335 = sand.u32 1, 7
        %s336 = ssub.s32 1, %s335
        %s337 = scalar_lea.vmem %s308, %s336
        %s338 = ssub.s32 1, %s335
        %s339 = scalar_lea.vmem %s309, %s338 [#allocation2]
        %s340 = sshllo.u32 0, %s335
        loop: start=0, step=1, limit=1
        $region207: #{encoder_rnn_forward.1} parent=205 // loop_pre_header
          _
        $region208: #{encoder_rnn_forward.1} parent=205 // loop_header
          %s342 = sphi 0, %s346
          %p343 = scmp.ge.s32.totalorder %s342, 1
          %s347 = sphi %s337, %s337
          %s348 = sphi %s339, %s339
        $region209: #{encoder_rnn_forward.1} parent=205 // loop_header_branch
          %345 = sbr.rel (%p343) target = $region213
        $region210: #{encoder_rnn_forward.1} parent=205 // loop_body
          %v349 = vld [vmem:[%s347] sm:%s340]
          %350 = vst [vmem:[%s348] sm:%s340] %v349
        $region211: #{encoder_rnn_forward.1} parent=205 // loop_footer
          %s346 = sadd.s32 1, %s342
        $region212: #{encoder_rnn_forward.1} parent=205 // loop_footer_branch
          %341 = sbr.rel target = $region208
        $region213: #{encoder_rnn_forward.1} parent=205 // loop_exit
          _
      $region206: #{encoder_rnn_forward.1} parent=190 // pred_fallthru
        _
    $region191: #{encoder_rnn_forward.1} parent=1 // pred_fallthru
      _
    // Predicated region
    $region192: #{encoder_rnn_forward.1} parent=1 // pred_check
      %p316 = pneg %p312
    $region193: #{encoder_rnn_forward.1} parent=1 // pred_check_branch
      %318 = sbr.rel (%p316) target = $region195
    $region194: #{encoder_rnn_forward.1} parent=1 // pred_region
      %s319 = sshllo.u32 0, 1
      loop: start=0, step=1, limit=1
      $region196: #{encoder_rnn_forward.1} parent=194 // loop_pre_header
        _
      $region197: #{encoder_rnn_forward.1} parent=194 // loop_header
        %s321 = sphi 0, %s325
        %p322 = scmp.ge.s32.totalorder %s321, 1
        %s326 = sphi %s308, %s308
        %s327 = sphi %s309, %s309
      $region198: #{encoder_rnn_forward.1} parent=194 // loop_header_branch
        %324 = sbr.rel (%p322) target = $region202
      $region199: #{encoder_rnn_forward.1} parent=194 // loop_body
        %v328 = vld [vmem:[%s326] sm:%s319]
        %329 = vst [vmem:[%s327] sm:%s319] %v328
      $region200: #{encoder_rnn_forward.1} parent=194 // loop_footer
        %s325 = sadd.s32 1, %s321
      $region201: #{encoder_rnn_forward.1} parent=194 // loop_footer_branch
        %320 = sbr.rel target = $region197
      $region202: #{encoder_rnn_forward.1} parent=194 // loop_exit
        _
    $region195: #{encoder_rnn_forward.1} parent=1 // pred_fallthru
      _
    // Predicated region
    $region214: #{encoder_rnn_forward.1} parent=1 // pred_check
      _
    $region215: #{encoder_rnn_forward.1} parent=1 // pred_check_branch
      %353 = sbr.rel (0) target = $region217
    $region216: #{encoder_rnn_forward.1} parent=1 // pred_region
      %354 = vsyncadd %s310, 16
    $region217: #{encoder_rnn_forward.1} parent=1 // pred_fallthru
      _
    %s355 = sld [smem:[#allocation4 + $0x6]]
    %s356 = scalar_lea.vmem %s1, %s355
    %s357 = scalar_lea.vmem [#allocation2], 6
    %s358 = scalar_lea.sflag [#allocation3], 6
    %p360 = scmp.lt.u32.totalorder 1, 8
    %p361 = pneg %p360
    // Predicated region
    $region218: #{encoder_rnn_forward.1} parent=1 // pred_check
      _
    $region219: #{encoder_rnn_forward.1} parent=1 // pred_check_branch
      %363 = sbr.rel (%p360) target = $region221
    $region220: #{encoder_rnn_forward.1} parent=1 // pred_region
      %s378 = sand.u32 1, 7
      %p379 = scmp.eq.s32.totalorder %s378, 0
      %p380 = pneg %p379
      // Predicated region
      $region233: #{encoder_rnn_forward.1} parent=220 // pred_check
        _
      $region234: #{encoder_rnn_forward.1} parent=220 // pred_check_branch
        %382 = sbr.rel (%p379) target = $region236
      $region235: #{encoder_rnn_forward.1} parent=220 // pred_region
        %s383 = sand.u32 1, 7
        %s384 = ssub.s32 1, %s383
        %s385 = scalar_lea.vmem %s356, %s384
        %s386 = ssub.s32 1, %s383
        %s387 = scalar_lea.vmem %s357, %s386 [#allocation2]
        %s388 = sshllo.u32 0, %s383
        loop: start=0, step=1, limit=1
        $region237: #{encoder_rnn_forward.1} parent=235 // loop_pre_header
          _
        $region238: #{encoder_rnn_forward.1} parent=235 // loop_header
          %s390 = sphi 0, %s394
          %p391 = scmp.ge.s32.totalorder %s390, 1
          %s395 = sphi %s385, %s385
          %s396 = sphi %s387, %s387
        $region239: #{encoder_rnn_forward.1} parent=235 // loop_header_branch
          %393 = sbr.rel (%p391) target = $region243
        $region240: #{encoder_rnn_forward.1} parent=235 // loop_body
          %v397 = vld [vmem:[%s395] sm:%s388]
          %398 = vst [vmem:[%s396] sm:%s388] %v397
        $region241: #{encoder_rnn_forward.1} parent=235 // loop_footer
          %s394 = sadd.s32 1, %s390
        $region242: #{encoder_rnn_forward.1} parent=235 // loop_footer_branch
          %389 = sbr.rel target = $region238
        $region243: #{encoder_rnn_forward.1} parent=235 // loop_exit
          _
      $region236: #{encoder_rnn_forward.1} parent=220 // pred_fallthru
        _
    $region221: #{encoder_rnn_forward.1} parent=1 // pred_fallthru
      _
    // Predicated region
    $region222: #{encoder_rnn_forward.1} parent=1 // pred_check
      %p364 = pneg %p360
    $region223: #{encoder_rnn_forward.1} parent=1 // pred_check_branch
      %366 = sbr.rel (%p364) target = $region225
    $region224: #{encoder_rnn_forward.1} parent=1 // pred_region
      %s367 = sshllo.u32 0, 1
      loop: start=0, step=1, limit=1
      $region226: #{encoder_rnn_forward.1} parent=224 // loop_pre_header
        _
      $region227: #{encoder_rnn_forward.1} parent=224 // loop_header
        %s369 = sphi 0, %s373
        %p370 = scmp.ge.s32.totalorder %s369, 1
        %s374 = sphi %s356, %s356
        %s375 = sphi %s357, %s357
      $region228: #{encoder_rnn_forward.1} parent=224 // loop_header_branch
        %372 = sbr.rel (%p370) target = $region232
      $region229: #{encoder_rnn_forward.1} parent=224 // loop_body
        %v376 = vld [vmem:[%s374] sm:%s367]
        %377 = vst [vmem:[%s375] sm:%s367] %v376
      $region230: #{encoder_rnn_forward.1} parent=224 // loop_footer
        %s373 = sadd.s32 1, %s369
      $region231: #{encoder_rnn_forward.1} parent=224 // loop_footer_branch
        %368 = sbr.rel target = $region227
      $region232: #{encoder_rnn_forward.1} parent=224 // loop_exit
        _
    $region225: #{encoder_rnn_forward.1} parent=1 // pred_fallthru
      _
    // Predicated region
    $region244: #{encoder_rnn_forward.1} parent=1 // pred_check
      _
    $region245: #{encoder_rnn_forward.1} parent=1 // pred_check_branch
      %401 = sbr.rel (0) target = $region247
    $region246: #{encoder_rnn_forward.1} parent=1 // pred_region
      %402 = vsyncadd %s358, 16
    $region247: #{encoder_rnn_forward.1} parent=1 // pred_fallthru
      _
    %s403 = sld [smem:[#allocation4 + $0x7]]
    %s404 = scalar_lea.vmem %s1, %s403
    %s405 = scalar_lea.vmem [#allocation2], 7
    %s406 = scalar_lea.sflag [#allocation3], 7
    %p408 = scmp.lt.u32.totalorder 1, 8
    %p409 = pneg %p408
    // Predicated region
    $region248: #{encoder_rnn_forward.1} parent=1 // pred_check
      _
    $region249: #{encoder_rnn_forward.1} parent=1 // pred_check_branch
      %411 = sbr.rel (%p408) target = $region251
    $region250: #{encoder_rnn_forward.1} parent=1 // pred_region
      %s426 = sand.u32 1, 7
      %p427 = scmp.eq.s32.totalorder %s426, 0
      %p428 = pneg %p427
      // Predicated region
      $region263: #{encoder_rnn_forward.1} parent=250 // pred_check
        _
      $region264: #{encoder_rnn_forward.1} parent=250 // pred_check_branch
        %430 = sbr.rel (%p427) target = $region266
      $region265: #{encoder_rnn_forward.1} parent=250 // pred_region
        %s431 = sand.u32 1, 7
        %s432 = ssub.s32 1, %s431
        %s433 = scalar_lea.vmem %s404, %s432
        %s434 = ssub.s32 1, %s431
        %s435 = scalar_lea.vmem %s405, %s434 [#allocation2]
        %s436 = sshllo.u32 0, %s431
        loop: start=0, step=1, limit=1
        $region267: #{encoder_rnn_forward.1} parent=265 // loop_pre_header
          _
        $region268: #{encoder_rnn_forward.1} parent=265 // loop_header
          %s438 = sphi 0, %s442
          %p439 = scmp.ge.s32.totalorder %s438, 1
          %s443 = sphi %s433, %s433
          %s444 = sphi %s435, %s435
        $region269: #{encoder_rnn_forward.1} parent=265 // loop_header_branch
          %441 = sbr.rel (%p439) target = $region273
        $region270: #{encoder_rnn_forward.1} parent=265 // loop_body
          %v445 = vld [vmem:[%s443] sm:%s436]
          %446 = vst [vmem:[%s444] sm:%s436] %v445
        $region271: #{encoder_rnn_forward.1} parent=265 // loop_footer
          %s442 = sadd.s32 1, %s438
        $region272: #{encoder_rnn_forward.1} parent=265 // loop_footer_branch
          %437 = sbr.rel target = $region268
        $region273: #{encoder_rnn_forward.1} parent=265 // loop_exit
          _
      $region266: #{encoder_rnn_forward.1} parent=250 // pred_fallthru
        _
    $region251: #{encoder_rnn_forward.1} parent=1 // pred_fallthru
      _
    // Predicated region
    $region252: #{encoder_rnn_forward.1} parent=1 // pred_check
      %p412 = pneg %p408
    $region253: #{encoder_rnn_forward.1} parent=1 // pred_check_branch
      %414 = sbr.rel (%p412) target = $region255
    $region254: #{encoder_rnn_forward.1} parent=1 // pred_region
      %s415 = sshllo.u32 0, 1
      loop: start=0, step=1, limit=1
      $region256: #{encoder_rnn_forward.1} parent=254 // loop_pre_header
        _
      $region257: #{encoder_rnn_forward.1} parent=254 // loop_header
        %s417 = sphi 0, %s421
        %p418 = scmp.ge.s32.totalorder %s417, 1
        %s422 = sphi %s404, %s404
        %s423 = sphi %s405, %s405
      $region258: #{encoder_rnn_forward.1} parent=254 // loop_header_branch
        %420 = sbr.rel (%p418) target = $region262
      $region259: #{encoder_rnn_forward.1} parent=254 // loop_body
        %v424 = vld [vmem:[%s422] sm:%s415]
        %425 = vst [vmem:[%s423] sm:%s415] %v424
      $region260: #{encoder_rnn_forward.1} parent=254 // loop_footer
        %s421 = sadd.s32 1, %s417
      $region261: #{encoder_rnn_forward.1} parent=254 // loop_footer_branch
        %416 = sbr.rel target = $region257
      $region262: #{encoder_rnn_forward.1} parent=254 // loop_exit
        _
    $region255: #{encoder_rnn_forward.1} parent=1 // pred_fallthru
      _
    // Predicated region
    $region274: #{encoder_rnn_forward.1} parent=1 // pred_check
      _
    $region275: #{encoder_rnn_forward.1} parent=1 // pred_check_branch
      %449 = sbr.rel (0) target = $region277
    $region276: #{encoder_rnn_forward.1} parent=1 // pred_region
      %450 = vsyncadd %s406, 16
    $region277: #{encoder_rnn_forward.1} parent=1 // pred_fallthru
      _
    %v451 = vld [vmem:[#allocation8] sm:$0xff]
    %v452 = vld [vmem:[#allocation8 + $0x8] sm:$0xf]
    %v453 = vld [vmem:[#allocation8 + $0xc] sm:$0xff]
    %v454 = vld [vmem:[#allocation8 + $0x14] sm:$0xf]
    %v455 = vld [vmem:[#allocation8 + $0x18] sm:$0xff]
    %v456 = vld [vmem:[#allocation8 + $0x20] sm:$0xf]
    %v457 = vld [vmem:[#allocation8 + $0x24] sm:$0xff]
    %v458 = vld [vmem:[#allocation8 + $0x2c] sm:$0xf]
    %v459 = vld [vmem:[#allocation8 + $0x30] sm:$0xff]
    %v460 = vld [vmem:[#allocation8 + $0x38] sm:$0xf]
    %v461 = vld [vmem:[#allocation8 + $0x3c] sm:$0xff]
    %v462 = vld [vmem:[#allocation8 + $0x44] sm:$0xf]
    %v463 = vld [vmem:[#allocation8 + $0x48] sm:$0xff]
    %v464 = vld [vmem:[#allocation8 + $0x50] sm:$0xf]
    %v465 = vld [vmem:[#allocation8 + $0x54] sm:$0xff]
    %v466 = vld [vmem:[#allocation8 + $0x5c] sm:$0xf]
    %v467 = vld [vmem:[#allocation8 + $0x60] sm:$0xff]
    %v468 = vld [vmem:[#allocation8 + $0x68] sm:$0xf]
    %v469 = vld [vmem:[#allocation8 + $0x6c] sm:$0xff]
    %v470 = vld [vmem:[#allocation8 + $0x74] sm:$0xf]
    %v471 = vld [vmem:[#allocation8 + $0x78] sm:$0xff]
    %v472 = vld [vmem:[#allocation8 + $0x80] sm:$0xf]
    %v473 = vld [vmem:[#allocation8 + $0x84] sm:$0xff]
    %v474 = vld [vmem:[#allocation8 + $0x8c] sm:$0xf]
    %v475 = vld [vmem:[#allocation8 + $0x90] sm:$0xff]
    %v476 = vld [vmem:[#allocation8 + $0x98] sm:$0xf]
    %v477 = vld [vmem:[#allocation8 + $0x9c] sm:$0xff]
    %v478 = vld [vmem:[#allocation8 + $0xa4] sm:$0xf]
    %v479 = vld [vmem:[#allocation8 + $0xa8] sm:$0xff]
    %v480 = vld [vmem:[#allocation8 + $0xb0] sm:$0xf]
    %v481 = vld [vmem:[#allocation8 + $0xb4] sm:$0xff]
    %v482 = vld [vmem:[#allocation8 + $0xbc] sm:$0xf]
    %v483 = vld [vmem:[#allocation9] sm:$0xff]
    %v484 = vld [vmem:[#allocation9 + $0x8] sm:$0xf]
    %v485 = vld [vmem:[#allocation9 + $0xc] sm:$0xff]
    %v486 = vld [vmem:[#allocation9 + $0x14] sm:$0xf]
    %v487 = vld [vmem:[#allocation9 + $0x18] sm:$0xff]
    %v488 = vld [vmem:[#allocation9 + $0x20] sm:$0xf]
    %v489 = vld [vmem:[#allocation9 + $0x24] sm:$0xff]
    %v490 = vld [vmem:[#allocation9 + $0x2c] sm:$0xf]
    %v491 = vld [vmem:[#allocation9 + $0x30] sm:$0xff]
    %v492 = vld [vmem:[#allocation9 + $0x38] sm:$0xf]
    %v493 = vld [vmem:[#allocation9 + $0x3c] sm:$0xff]
    %v494 = vld [vmem:[#allocation9 + $0x44] sm:$0xf]
    %v495 = vld [vmem:[#allocation9 + $0x48] sm:$0xff]
    %v496 = vld [vmem:[#allocation9 + $0x50] sm:$0xf]
    %v497 = vld [vmem:[#allocation9 + $0x54] sm:$0xff]
    %v498 = vld [vmem:[#allocation9 + $0x5c] sm:$0xf]
    %v499 = vld [vmem:[#allocation9 + $0x60] sm:$0xff]
    %v500 = vld [vmem:[#allocation9 + $0x68] sm:$0xf]
    %v501 = vld [vmem:[#allocation9 + $0x6c] sm:$0xff]
    %v502 = vld [vmem:[#allocation9 + $0x74] sm:$0xf]
    %v503 = vld [vmem:[#allocation9 + $0x78] sm:$0xff]
    %v504 = vld [vmem:[#allocation9 + $0x80] sm:$0xf]
    %v505 = vld [vmem:[#allocation9 + $0x84] sm:$0xff]
    %v506 = vld [vmem:[#allocation9 + $0x8c] sm:$0xf]
    %v507 = vld [vmem:[#allocation9 + $0x90] sm:$0xff]
    %v508 = vld [vmem:[#allocation9 + $0x98] sm:$0xf]
    %v509 = vld [vmem:[#allocation9 + $0x9c] sm:$0xff]
    %v510 = vld [vmem:[#allocation9 + $0xa4] sm:$0xf]
    %v511 = vld [vmem:[#allocation9 + $0xa8] sm:$0xff]
    %v512 = vld [vmem:[#allocation9 + $0xb0] sm:$0xf]
    %v513 = vld [vmem:[#allocation9 + $0xb4] sm:$0xff]
    %v514 = vld [vmem:[#allocation9 + $0xbc] sm:$0xf]
    %v515 = vld [vmem:[%s4] sm:$0x7]
    %v516 = vld [vmem:[%s5] sm:$0x7]
    %v517 = vld [vmem:[%s6] sm:$0x1]
    %v518 = vpack.c.bf16 %v517, %v517
    %v551 = vunpack.c.l.b16 %v483
    %v552 = vunpack.c.h.b16 %v483
    %v553 = vunpack.c.l.b16 %v484
    %v554 = vunpack.c.l.b16 %v485
    %v555 = vunpack.c.h.b16 %v485
    %v556 = vunpack.c.l.b16 %v486
    %v557 = vunpack.c.l.b16 %v487
    %v558 = vunpack.c.h.b16 %v487
    %v559 = vunpack.c.l.b16 %v488
    %v560 = vunpack.c.l.b16 %v489
    %v561 = vunpack.c.h.b16 %v489
    %v562 = vunpack.c.l.b16 %v490
    %v563 = vunpack.c.l.b16 %v491
    %v564 = vunpack.c.h.b16 %v491
    %v565 = vunpack.c.l.b16 %v492
    %v566 = vunpack.c.l.b16 %v493
    %v567 = vunpack.c.h.b16 %v493
    %v568 = vunpack.c.l.b16 %v494
    %v569 = vunpack.c.l.b16 %v495
    %v570 = vunpack.c.h.b16 %v495
    %v571 = vunpack.c.l.b16 %v496
    %v572 = vunpack.c.l.b16 %v497
    %v573 = vunpack.c.h.b16 %v497
    %v574 = vunpack.c.l.b16 %v498
    %v575 = vunpack.c.l.b16 %v499
    %v576 = vunpack.c.h.b16 %v499
    %v577 = vunpack.c.l.b16 %v500
    %v578 = vunpack.c.l.b16 %v501
    %v579 = vunpack.c.h.b16 %v501
    %v580 = vunpack.c.l.b16 %v502
    %v581 = vunpack.c.l.b16 %v503
    %v582 = vunpack.c.h.b16 %v503
    %v583 = vunpack.c.l.b16 %v504
    %v584 = vunpack.c.l.b16 %v505
    %v585 = vunpack.c.h.b16 %v505
    %v586 = vunpack.c.l.b16 %v506
    %v587 = vunpack.c.l.b16 %v507
    %v588 = vunpack.c.h.b16 %v507
    %v589 = vunpack.c.l.b16 %v508
    %v590 = vunpack.c.l.b16 %v509
    %v591 = vunpack.c.h.b16 %v509
    %v592 = vunpack.c.l.b16 %v510
    %v593 = vunpack.c.l.b16 %v511
    %v594 = vunpack.c.h.b16 %v511
    %v595 = vunpack.c.l.b16 %v512
    %v596 = vunpack.c.l.b16 %v513
    %v597 = vunpack.c.h.b16 %v513
    %v598 = vunpack.c.l.b16 %v514
    %v599 = vpack.c.b16 %v554, %v551
    %v600 = vpack.c.b16 %v555, %v552
    %v601 = vpack.c.b16 %v556, %v553
    %v602 = vpack.c.b16 %v560, %v557
    %v603 = vpack.c.b16 %v561, %v558
    %v604 = vpack.c.b16 %v562, %v559
    %v605 = vpack.c.b16 %v566, %v563
    %v606 = vpack.c.b16 %v567, %v564
    %v607 = vpack.c.b16 %v568, %v565
    %v608 = vpack.c.b16 %v572, %v569
    %v609 = vpack.c.b16 %v573, %v570
    %v610 = vpack.c.b16 %v574, %v571
    %v611 = vpack.c.b16 %v578, %v575
    %v612 = vpack.c.b16 %v579, %v576
    %v613 = vpack.c.b16 %v580, %v577
    %v614 = vpack.c.b16 %v584, %v581
    %v615 = vpack.c.b16 %v585, %v582
    %v616 = vpack.c.b16 %v586, %v583
    %v617 = vpack.c.b16 %v590, %v587
    %v618 = vpack.c.b16 %v591, %v588
    %v619 = vpack.c.b16 %v592, %v589
    %v620 = vpack.c.b16 %v596, %v593
    %v621 = vpack.c.b16 %v597, %v594
    %v622 = vpack.c.b16 %v598, %v595
    %v648 = vlaneseq
    %v649 = vshrl.u32 %v648, 7
    %v650 = vsub.s32 0, %v649
    %v651 = vrot.slane %v516, %v650
    %v652 = vlaneseq
    %v653 = vshrl.u32 %v652, 7
    %v654 = vsub.s32 1, %v653
    %v655 = vrot.slane %v516, %v654
    %v656 = vlaneseq
    %v657 = vshrl.u32 %v656, 7
    %v658 = vsub.s32 2, %v657
    %v659 = vrot.slane %v516, %v658
    %663 = vmatprep.subr.bf16.mxu0 %v600
    %664 = vmatpush1.bf16.msra.mxu0 %v599
    %665 = vmatprep.subr.bf16.mxu0 %v603
    %666 = vmatpush1.bf16.msra.mxu0 %v602
    %667 = vmatprep.subr.bf16.mxu0 %v606
    %668 = vmatpush1.bf16.msra.mxu0 %v605
    %669 = vmatprep.subr.bf16.mxu0 %v609
    %670 = vmatpush1.bf16.msra.mxu0 %v608
    %671 = vmatprep.subr.bf16.mxu0 %v612
    %672 = vmatpush1.bf16.msra.mxu0 %v611
    %673 = vmatprep.subr.bf16.mxu0 %v615
    %674 = vmatpush1.bf16.msra.mxu0 %v614
    %675 = vmatprep.subr.bf16.mxu0 %v618
    %676 = vmatpush1.bf16.msra.mxu0 %v617
    %677 = vmatprep.subr.bf16.mxu0 %v621
    %678 = vmatpush1.bf16.msra.mxu0 %v620
    %679 = vmatprep.subr.bf16.mxu0 0
    %680 = vmatpush1.bf16.msra.mxu0 0
    %681 = vmatprep.subr.bf16.mxu0 0
    %682 = vmatpush1.bf16.msra.mxu0 0
    %683 = vmatprep.subr.bf16.mxu0 0
    %684 = vmatpush1.bf16.msra.mxu0 0
    %685 = vmatprep.subr.bf16.mxu0 0
    %686 = vmatpush1.bf16.msra.mxu0 0
    %687 = vmatprep.subr.bf16.mxu0 0
    %688 = vmatpush1.bf16.msra.mxu0 0
    %689 = vmatprep.subr.bf16.mxu0 0
    %690 = vmatpush1.bf16.msra.mxu0 0
    %691 = vmatprep.subr.bf16.mxu0 0
    %692 = vmatpush1.bf16.msra.mxu0 0
    %693 = vmatprep.subr.bf16.mxu0 0
    %694 = vmatpush1.bf16.msra.mxu0 0
    %695 = vmatprep.mubr.bf16.mxu0 0
    %696 = vmatmul.mubr.bf16.gmra.mrb[0].mxu0 %v518
    %v697 = vpop.f32.mrb[0].mxu0
    %v698 = vadd.f32 %v651, %v697
    %v699 = vpop.f32.mrb[0].mxu0
    %v700 = vadd.f32 %v655, %v699
    %v701 = vpop.f32.mrb[0].mxu0
    %v702 = vpop.f32.mrb[0].mxu0
    %703 = vdwg.mxu0
    %704 = vmatprep.subr.bf16.mxu0 0
    %705 = vmatpush1.bf16.msra.mxu0 %v601
    %706 = vmatprep.subr.bf16.mxu0 0
    %707 = vmatpush1.bf16.msra.mxu0 %v604
    %708 = vmatprep.subr.bf16.mxu0 0
    %709 = vmatpush1.bf16.msra.mxu0 %v607
    %710 = vmatprep.subr.bf16.mxu0 0
    %711 = vmatpush1.bf16.msra.mxu0 %v610
    %712 = vmatprep.subr.bf16.mxu0 0
    %713 = vmatpush1.bf16.msra.mxu0 %v613
    %714 = vmatprep.subr.bf16.mxu0 0
    %715 = vmatpush1.bf16.msra.mxu0 %v616
    %716 = vmatprep.subr.bf16.mxu0 0
    %717 = vmatpush1.bf16.msra.mxu0 %v619
    %718 = vmatprep.subr.bf16.mxu0 0
    %719 = vmatpush1.bf16.msra.mxu0 %v622
    %720 = vmatprep.subr.bf16.mxu0 0
    %721 = vmatpush1.bf16.msra.mxu0 0
    %722 = vmatprep.subr.bf16.mxu0 0
    %723 = vmatpush1.bf16.msra.mxu0 0
    %724 = vmatprep.subr.bf16.mxu0 0
    %725 = vmatpush1.bf16.msra.mxu0 0
    %726 = vmatprep.subr.bf16.mxu0 0
    %727 = vmatpush1.bf16.msra.mxu0 0
    %728 = vmatprep.subr.bf16.mxu0 0
    %729 = vmatpush1.bf16.msra.mxu0 0
    %730 = vmatprep.subr.bf16.mxu0 0
    %731 = vmatpush1.bf16.msra.mxu0 0
    %732 = vmatprep.subr.bf16.mxu0 0
    %733 = vmatpush1.bf16.msra.mxu0 0
    %734 = vmatprep.subr.bf16.mxu0 0
    %735 = vmatpush1.bf16.msra.mxu0 0
    %736 = vmatprep.mubr.bf16.mxu0 0
    %737 = vmatmul.mubr.bf16.gmra.mrb[0].mxu0 %v518
    %v738 = vpop.f32.mrb[0].mxu0
    %v739 = vadd.f32 %v659, %v738
    %v740 = vpop.f32.mrb[0].mxu0
    %v741 = vpop.f32.mrb[0].mxu0
    %v742 = vpop.f32.mrb[0].mxu0
    %743 = vdwg.mxu0
    %s744 = smul.u32 1, 1
    %s745 = sshll.u32 %s744, 4
    %746 = dma.done [#allocation3], %s745
    %s747 = sshll.u32 %s744, 4
    %748 = dma.done %s118, %s747
    %s749 = sshll.u32 %s744, 4
    %750 = dma.done %s166, %s749
    %s751 = sshll.u32 %s744, 4
    %752 = dma.done %s214, %s751
    %s753 = sshll.u32 %s744, 4
    %754 = dma.done %s262, %s753
    %s755 = sshll.u32 %s744, 4
    %756 = dma.done %s310, %s755
    %s757 = sshll.u32 %s744, 4
    %758 = dma.done %s358, %s757
    %s759 = sshll.u32 %s744, 4
    %760 = dma.done %s406, %s759
    %v761 = vld [vmem:[#allocation2] sm:$0xff]
    %v762 = vpack.c.bf16 %v761, %v761
    %v764 = vlaneseq
    %v765 = vshrl.u32 %v764, 7
    %v766 = vsub.s32 0, %v765
    %v767 = vrot.slane %v515, %v766
    %v768 = vlaneseq
    %v769 = vshrl.u32 %v768, 7
    %v770 = vsub.s32 1, %v769
    %v771 = vrot.slane %v515, %v770
    %v772 = vlaneseq
    %v773 = vshrl.u32 %v772, 7
    %v774 = vsub.s32 2, %v773
    %v775 = vrot.slane %v515, %v774
    %v811 = vunpack.c.l.b16 %v451
    %v812 = vunpack.c.h.b16 %v451
    %v813 = vunpack.c.l.b16 %v452
    %v814 = vunpack.c.l.b16 %v453
    %v815 = vunpack.c.h.b16 %v453
    %v816 = vunpack.c.l.b16 %v454
    %v817 = vunpack.c.l.b16 %v455
    %v818 = vunpack.c.h.b16 %v455
    %v819 = vunpack.c.l.b16 %v456
    %v820 = vunpack.c.l.b16 %v457
    %v821 = vunpack.c.h.b16 %v457
    %v822 = vunpack.c.l.b16 %v458
    %v823 = vunpack.c.l.b16 %v459
    %v824 = vunpack.c.h.b16 %v459
    %v825 = vunpack.c.l.b16 %v460
    %v826 = vunpack.c.l.b16 %v461
    %v827 = vunpack.c.h.b16 %v461
    %v828 = vunpack.c.l.b16 %v462
    %v829 = vunpack.c.l.b16 %v463
    %v830 = vunpack.c.h.b16 %v463
    %v831 = vunpack.c.l.b16 %v464
    %v832 = vunpack.c.l.b16 %v465
    %v833 = vunpack.c.h.b16 %v465
    %v834 = vunpack.c.l.b16 %v466
    %v835 = vunpack.c.l.b16 %v467
    %v836 = vunpack.c.h.b16 %v467
    %v837 = vunpack.c.l.b16 %v468
    %v838 = vunpack.c.l.b16 %v469
    %v839 = vunpack.c.h.b16 %v469
    %v840 = vunpack.c.l.b16 %v470
    %v841 = vunpack.c.l.b16 %v471
    %v842 = vunpack.c.h.b16 %v471
    %v843 = vunpack.c.l.b16 %v472
    %v844 = vunpack.c.l.b16 %v473
    %v845 = vunpack.c.h.b16 %v473
    %v846 = vunpack.c.l.b16 %v474
    %v847 = vunpack.c.l.b16 %v475
    %v848 = vunpack.c.h.b16 %v475
    %v849 = vunpack.c.l.b16 %v476
    %v850 = vunpack.c.l.b16 %v477
    %v851 = vunpack.c.h.b16 %v477
    %v852 = vunpack.c.l.b16 %v478
    %v853 = vunpack.c.l.b16 %v479
    %v854 = vunpack.c.h.b16 %v479
    %v855 = vunpack.c.l.b16 %v480
    %v856 = vunpack.c.l.b16 %v481
    %v857 = vunpack.c.h.b16 %v481
    %v858 = vunpack.c.l.b16 %v482
    %v859 = vpack.c.b16 %v814, %v811
    %v860 = vpack.c.b16 %v815, %v812
    %v861 = vpack.c.b16 %v816, %v813
    %v862 = vpack.c.b16 %v820, %v817
    %v863 = vpack.c.b16 %v821, %v818
    %v864 = vpack.c.b16 %v822, %v819
    %v865 = vpack.c.b16 %v826, %v823
    %v866 = vpack.c.b16 %v827, %v824
    %v867 = vpack.c.b16 %v828, %v825
    %v868 = vpack.c.b16 %v832, %v829
    %v869 = vpack.c.b16 %v833, %v830
    %v870 = vpack.c.b16 %v834, %v831
    %v871 = vpack.c.b16 %v838, %v835
    %v872 = vpack.c.b16 %v839, %v836
    %v873 = vpack.c.b16 %v840, %v837
    %v874 = vpack.c.b16 %v844, %v841
    %v875 = vpack.c.b16 %v845, %v842
    %v876 = vpack.c.b16 %v846, %v843
    %v877 = vpack.c.b16 %v850, %v847
    %v878 = vpack.c.b16 %v851, %v848
    %v879 = vpack.c.b16 %v852, %v849
    %v880 = vpack.c.b16 %v856, %v853
    %v881 = vpack.c.b16 %v857, %v854
    %v882 = vpack.c.b16 %v858, %v855
    %907 = vmatprep.subr.bf16.mxu0 %v860
    %908 = vmatpush1.bf16.msra.mxu0 %v859
    %909 = vmatprep.subr.bf16.mxu0 %v863
    %910 = vmatpush1.bf16.msra.mxu0 %v862
    %911 = vmatprep.subr.bf16.mxu0 %v866
    %912 = vmatpush1.bf16.msra.mxu0 %v865
    %913 = vmatprep.subr.bf16.mxu0 %v869
    %914 = vmatpush1.bf16.msra.mxu0 %v868
    %915 = vmatprep.subr.bf16.mxu0 %v872
    %916 = vmatpush1.bf16.msra.mxu0 %v871
    %917 = vmatprep.subr.bf16.mxu0 %v875
    %918 = vmatpush1.bf16.msra.mxu0 %v874
    %919 = vmatprep.subr.bf16.mxu0 %v878
    %920 = vmatpush1.bf16.msra.mxu0 %v877
    %921 = vmatprep.subr.bf16.mxu0 %v881
    %922 = vmatpush1.bf16.msra.mxu0 %v880
    %923 = vmatprep.subr.bf16.mxu0 0
    %924 = vmatpush1.bf16.msra.mxu0 0
    %925 = vmatprep.subr.bf16.mxu0 0
    %926 = vmatpush1.bf16.msra.mxu0 0
    %927 = vmatprep.subr.bf16.mxu0 0
    %928 = vmatpush1.bf16.msra.mxu0 0
    %929 = vmatprep.subr.bf16.mxu0 0
    %930 = vmatpush1.bf16.msra.mxu0 0
    %931 = vmatprep.subr.bf16.mxu0 0
    %932 = vmatpush1.bf16.msra.mxu0 0
    %933 = vmatprep.subr.bf16.mxu0 0
    %934 = vmatpush1.bf16.msra.mxu0 0
    %935 = vmatprep.subr.bf16.mxu0 0
    %936 = vmatpush1.bf16.msra.mxu0 0
    %937 = vmatprep.subr.bf16.mxu0 0
    %938 = vmatpush1.bf16.msra.mxu0 0
    %939 = vmatprep.mubr.bf16.mxu0 0
    %940 = vmatmul.mubr.bf16.gmra.mrb[0].mxu0 %v762
    %v941 = vpop.f32.mrb[0].mxu0
    %v942 = vadd.f32 %v767, %v941
    %v943 = vpop.f32.mrb[0].mxu0
    %v944 = vadd.f32 %v771, %v943
    %v945 = vpop.f32.mrb[0].mxu0
    %v946 = vpop.f32.mrb[0].mxu0
    %947 = vdwg.mxu0
    %948 = vmatprep.subr.bf16.mxu0 0
    %949 = vmatpush1.bf16.msra.mxu0 %v861
    %950 = vmatprep.subr.bf16.mxu0 0
    %951 = vmatpush1.bf16.msra.mxu0 %v864
    %952 = vmatprep.subr.bf16.mxu0 0
    %953 = vmatpush1.bf16.msra.mxu0 %v867
    %954 = vmatprep.subr.bf16.mxu0 0
    %955 = vmatpush1.bf16.msra.mxu0 %v870
    %956 = vmatprep.subr.bf16.mxu0 0
    %957 = vmatpush1.bf16.msra.mxu0 %v873
    %958 = vmatprep.subr.bf16.mxu0 0
    %959 = vmatpush1.bf16.msra.mxu0 %v876
    %960 = vmatprep.subr.bf16.mxu0 0
    %961 = vmatpush1.bf16.msra.mxu0 %v879
    %962 = vmatprep.subr.bf16.mxu0 0
    %963 = vmatpush1.bf16.msra.mxu0 %v882
    %964 = vmatprep.subr.bf16.mxu0 0
    %965 = vmatpush1.bf16.msra.mxu0 0
    %966 = vmatprep.subr.bf16.mxu0 0
    %967 = vmatpush1.bf16.msra.mxu0 0
    %968 = vmatprep.subr.bf16.mxu0 0
    %969 = vmatpush1.bf16.msra.mxu0 0
    %970 = vmatprep.subr.bf16.mxu0 0
    %971 = vmatpush1.bf16.msra.mxu0 0
    %972 = vmatprep.subr.bf16.mxu0 0
    %973 = vmatpush1.bf16.msra.mxu0 0
    %974 = vmatprep.subr.bf16.mxu0 0
    %975 = vmatpush1.bf16.msra.mxu0 0
    %976 = vmatprep.subr.bf16.mxu0 0
    %977 = vmatpush1.bf16.msra.mxu0 0
    %978 = vmatprep.subr.bf16.mxu0 0
    %979 = vmatpush1.bf16.msra.mxu0 0
    %980 = vmatprep.mubr.bf16.mxu0 0
    %981 = vmatmul.mubr.bf16.gmra.mrb[0].mxu0 %v762
    %v982 = vpop.f32.mrb[0].mxu0
    %v983 = vadd.f32 %v775, %v982
    %v984 = vpop.f32.mrb[0].mxu0
    %v985 = vpop.f32.mrb[0].mxu0
    %v986 = vpop.f32.mrb[0].mxu0
    %987 = vdwg.mxu0
    %v988 = vadd.f32 %v942, %v698
    %v989 = vxor.u32 %v988, 2147483648
    %v990 = vmul.f32 %v989, 1.442695
    %v991 = vpow.pop %v990
    %v992 = vadd.f32 %v991, 1.0
    %v993 = vrcp.pop %v992
    %v994 = vmul.f32 1.0, %v993
    %v995 = vadd.f32 %v944, %v700
    %v996 = vxor.u32 %v995, 2147483648
    %v997 = vmul.f32 %v996, 1.442695
    %v998 = vpow.pop %v997
    %v999 = vadd.f32 %v998, 1.0
    %v1000 = vrcp.pop %v999
    %v1001 = vmul.f32 1.0, %v1000
    %v1002 = vmul.f32 %v994, %v739
    %v1003 = vadd.f32 %v983, %v1002
    %v1004 = vtanh.pop %v1003
    %v1005 = vsub.f32 1.0, %v1001
    %v1006 = vmul.f32 %v1005, %v1004
    %v1007 = vmul.f32 %v1001, %v517
    %v1008 = vadd.f32 %v1006, %v1007
    %v1009 = vpack.c.bf16 %v1008, %v1008
    %1010 = vmatprep.subr.bf16.mxu0 %v600
    %1011 = vmatpush1.bf16.msra.mxu0 %v599
    %1012 = vmatprep.subr.bf16.mxu0 %v603
    %1013 = vmatpush1.bf16.msra.mxu0 %v602
    %1014 = vmatprep.subr.bf16.mxu0 %v606
    %1015 = vmatpush1.bf16.msra.mxu0 %v605
    %1016 = vmatprep.subr.bf16.mxu0 %v609
    %1017 = vmatpush1.bf16.msra.mxu0 %v608
    %1018 = vmatprep.subr.bf16.mxu0 %v612
    %1019 = vmatpush1.bf16.msra.mxu0 %v611
    %1020 = vmatprep.subr.bf16.mxu0 %v615
    %1021 = vmatpush1.bf16.msra.mxu0 %v614
    %1022 = vmatprep.subr.bf16.mxu0 %v618
    %1023 = vmatpush1.bf16.msra.mxu0 %v617
    %1024 = vmatprep.subr.bf16.mxu0 %v621
    %1025 = vmatpush1.bf16.msra.mxu0 %v620
    %1026 = vmatprep.subr.bf16.mxu0 0
    %1027 = vmatpush1.bf16.msra.mxu0 0
    %1028 = vmatprep.subr.bf16.mxu0 0
    %1029 = vmatpush1.bf16.msra.mxu0 0
    %1030 = vmatprep.subr.bf16.mxu0 0
    %1031 = vmatpush1.bf16.msra.mxu0 0
    %1032 = vmatprep.subr.bf16.mxu0 0
    %1033 = vmatpush1.bf16.msra.mxu0 0
    %1034 = vmatprep.subr.bf16.mxu0 0
    %1035 = vmatpush1.bf16.msra.mxu0 0
    %1036 = vmatprep.subr.bf16.mxu0 0
    %1037 = vmatpush1.bf16.msra.mxu0 0
    %1038 = vmatprep.subr.bf16.mxu0 0
    %1039 = vmatpush1.bf16.msra.mxu0 0
    %1040 = vmatprep.subr.bf16.mxu0 0
    %1041 = vmatpush1.bf16.msra.mxu0 0
    %1042 = vmatprep.mubr.bf16.mxu0 0
    %1043 = vmatmul.mubr.bf16.gmra.mrb[0].mxu0 %v1009
    %v1044 = vpop.f32.mrb[0].mxu0
    %v1045 = vadd.f32 %v651, %v1044
    %v1046 = vpop.f32.mrb[0].mxu0
    %v1047 = vadd.f32 %v655, %v1046
    %v1048 = vpop.f32.mrb[0].mxu0
    %v1049 = vpop.f32.mrb[0].mxu0
    %1050 = vdwg.mxu0
    %1051 = vmatprep.subr.bf16.mxu0 0
    %1052 = vmatpush1.bf16.msra.mxu0 %v601
    %1053 = vmatprep.subr.bf16.mxu0 0
    %1054 = vmatpush1.bf16.msra.mxu0 %v604
    %1055 = vmatprep.subr.bf16.mxu0 0
    %1056 = vmatpush1.bf16.msra.mxu0 %v607
    %1057 = vmatprep.subr.bf16.mxu0 0
    %1058 = vmatpush1.bf16.msra.mxu0 %v610
    %1059 = vmatprep.subr.bf16.mxu0 0
    %1060 = vmatpush1.bf16.msra.mxu0 %v613
    %1061 = vmatprep.subr.bf16.mxu0 0
    %1062 = vmatpush1.bf16.msra.mxu0 %v616
    %1063 = vmatprep.subr.bf16.mxu0 0
    %1064 = vmatpush1.bf16.msra.mxu0 %v619
    %1065 = vmatprep.subr.bf16.mxu0 0
    %1066 = vmatpush1.bf16.msra.mxu0 %v622
    %1067 = vmatprep.subr.bf16.mxu0 0
    %1068 = vmatpush1.bf16.msra.mxu0 0
    %1069 = vmatprep.subr.bf16.mxu0 0
    %1070 = vmatpush1.bf16.msra.mxu0 0
    %1071 = vmatprep.subr.bf16.mxu0 0
    %1072 = vmatpush1.bf16.msra.mxu0 0
    %1073 = vmatprep.subr.bf16.mxu0 0
    %1074 = vmatpush1.bf16.msra.mxu0 0
    %1075 = vmatprep.subr.bf16.mxu0 0
    %1076 = vmatpush1.bf16.msra.mxu0 0
    %1077 = vmatprep.subr.bf16.mxu0 0
    %1078 = vmatpush1.bf16.msra.mxu0 0
    %1079 = vmatprep.subr.bf16.mxu0 0
    %1080 = vmatpush1.bf16.msra.mxu0 0
    %1081 = vmatprep.subr.bf16.mxu0 0
    %1082 = vmatpush1.bf16.msra.mxu0 0
    %1083 = vmatprep.mubr.bf16.mxu0 0
    %1084 = vmatmul.mubr.bf16.gmra.mrb[0].mxu0 %v1009
    %v1085 = vpop.f32.mrb[0].mxu0
    %v1086 = vadd.f32 %v659, %v1085
    %v1087 = vpop.f32.mrb[0].mxu0
    %v1088 = vpop.f32.mrb[0].mxu0
    %v1089 = vpop.f32.mrb[0].mxu0
    %1090 = vdwg.mxu0
    %v1092 = vrot.slane %v1045, 7
    %v1094 = vadd.f32 %v942, %v1092
    %v1095 = vxor.u32 %v1094, 2147483648
    %v1096 = vmul.f32 %v1095, 1.442695
    %v1097 = vpow.pop %v1096
    %v1098 = vadd.f32 %v1097, 1.0
    %v1099 = vrcp.pop %v1098
    %v1100 = vmul.f32 1.0, %v1099
    %v1102 = vrot.slane %v1047, 7
    %v1104 = vadd.f32 %v944, %v1102
    %v1105 = vxor.u32 %v1104, 2147483648
    %v1106 = vmul.f32 %v1105, 1.442695
    %v1107 = vpow.pop %v1106
    %v1108 = vadd.f32 %v1107, 1.0
    %v1109 = vrcp.pop %v1108
    %v1110 = vmul.f32 1.0, %v1109
    %v1112 = vrot.slane %v1086, 7
    %v1114 = vmul.f32 %v1100, %v1112
    %v1115 = vadd.f32 %v983, %v1114
    %v1116 = vtanh.pop %v1115
    %v1117 = vsub.f32 1.0, %v1110
    %v1118 = vmul.f32 %v1117, %v1116
    %v1120 = vrot.slane %v1008, 7
    %v1122 = vmul.f32 %v1110, %v1120
    %v1123 = vadd.f32 %v1118, %v1122
    %v1124 = vpack.c.bf16 %v1123, %v1123
    %v1126 = vshrl.u32 %v1124, 16
    %1129 = vmatprep.subr.bf16.mxu0 %v600
    %1130 = vmatpush1.bf16.msra.mxu0 %v599
    %1131 = vmatprep.subr.bf16.mxu0 %v603
    %1132 = vmatpush1.bf16.msra.mxu0 %v602
    %1133 = vmatprep.subr.bf16.mxu0 %v606
    %1134 = vmatpush1.bf16.msra.mxu0 %v605
    %1135 = vmatprep.subr.bf16.mxu0 %v609
    %1136 = vmatpush1.bf16.msra.mxu0 %v608
    %1137 = vmatprep.subr.bf16.mxu0 %v612
    %1138 = vmatpush1.bf16.msra.mxu0 %v611
    %1139 = vmatprep.subr.bf16.mxu0 %v615
    %1140 = vmatpush1.bf16.msra.mxu0 %v614
    %1141 = vmatprep.subr.bf16.mxu0 %v618
    %1142 = vmatpush1.bf16.msra.mxu0 %v617
    %1143 = vmatprep.subr.bf16.mxu0 %v621
    %1144 = vmatpush1.bf16.msra.mxu0 %v620
    %1145 = vmatprep.subr.bf16.mxu0 0
    %1146 = vmatpush1.bf16.msra.mxu0 0
    %1147 = vmatprep.subr.bf16.mxu0 0
    %1148 = vmatpush1.bf16.msra.mxu0 0
    %1149 = vmatprep.subr.bf16.mxu0 0
    %1150 = vmatpush1.bf16.msra.mxu0 0
    %1151 = vmatprep.subr.bf16.mxu0 0
    %1152 = vmatpush1.bf16.msra.mxu0 0
    %1153 = vmatprep.subr.bf16.mxu0 0
    %1154 = vmatpush1.bf16.msra.mxu0 0
    %1155 = vmatprep.subr.bf16.mxu0 0
    %1156 = vmatpush1.bf16.msra.mxu0 0
    %1157 = vmatprep.subr.bf16.mxu0 0
    %1158 = vmatpush1.bf16.msra.mxu0 0
    %1159 = vmatprep.subr.bf16.mxu0 0
    %1160 = vmatpush1.bf16.msra.mxu0 0
    %1161 = vmatprep.mubr.bf16.mxu0 0
    %1162 = vmatmul.mubr.bf16.gmra.mrb[0].mxu0 %v1126
    %v1163 = vpop.f32.mrb[0].mxu0
    %v1164 = vadd.f32 %v651, %v1163
    %v1165 = vpop.f32.mrb[0].mxu0
    %v1166 = vadd.f32 %v655, %v1165
    %v1167 = vpop.f32.mrb[0].mxu0
    %v1168 = vpop.f32.mrb[0].mxu0
    %1169 = vdwg.mxu0
    %1170 = vmatprep.subr.bf16.mxu0 0
    %1171 = vmatpush1.bf16.msra.mxu0 %v601
    %1172 = vmatprep.subr.bf16.mxu0 0
    %1173 = vmatpush1.bf16.msra.mxu0 %v604
    %1174 = vmatprep.subr.bf16.mxu0 0
    %1175 = vmatpush1.bf16.msra.mxu0 %v607
    %1176 = vmatprep.subr.bf16.mxu0 0
    %1177 = vmatpush1.bf16.msra.mxu0 %v610
    %1178 = vmatprep.subr.bf16.mxu0 0
    %1179 = vmatpush1.bf16.msra.mxu0 %v613
    %1180 = vmatprep.subr.bf16.mxu0 0
    %1181 = vmatpush1.bf16.msra.mxu0 %v616
    %1182 = vmatprep.subr.bf16.mxu0 0
    %1183 = vmatpush1.bf16.msra.mxu0 %v619
    %1184 = vmatprep.subr.bf16.mxu0 0
    %1185 = vmatpush1.bf16.msra.mxu0 %v622
    %1186 = vmatprep.subr.bf16.mxu0 0
    %1187 = vmatpush1.bf16.msra.mxu0 0
    %1188 = vmatprep.subr.bf16.mxu0 0
    %1189 = vmatpush1.bf16.msra.mxu0 0
    %1190 = vmatprep.subr.bf16.mxu0 0
    %1191 = vmatpush1.bf16.msra.mxu0 0
    %1192 = vmatprep.subr.bf16.mxu0 0
    %1193 = vmatpush1.bf16.msra.mxu0 0
    %1194 = vmatprep.subr.bf16.mxu0 0
    %1195 = vmatpush1.bf16.msra.mxu0 0
    %1196 = vmatprep.subr.bf16.mxu0 0
    %1197 = vmatpush1.bf16.msra.mxu0 0
    %1198 = vmatprep.subr.bf16.mxu0 0
    %1199 = vmatpush1.bf16.msra.mxu0 0
    %1200 = vmatprep.subr.bf16.mxu0 0
    %1201 = vmatpush1.bf16.msra.mxu0 0
    %1202 = vmatprep.mubr.bf16.mxu0 0
    %1203 = vmatmul.mubr.bf16.gmra.mrb[0].mxu0 %v1126
    %v1204 = vpop.f32.mrb[0].mxu0
    %v1205 = vadd.f32 %v659, %v1204
    %v1206 = vpop.f32.mrb[0].mxu0
    %v1207 = vpop.f32.mrb[0].mxu0
    %v1208 = vpop.f32.mrb[0].mxu0
    %1209 = vdwg.mxu0
    %v1211 = vrot.slane %v1164, 6
    %v1213 = vadd.f32 %v942, %v1211
    %v1214 = vxor.u32 %v1213, 2147483648
    %v1215 = vmul.f32 %v1214, 1.442695
    %v1216 = vpow.pop %v1215
    %v1217 = vadd.f32 %v1216, 1.0
    %v1218 = vrcp.pop %v1217
    %v1219 = vmul.f32 1.0, %v1218
    %v1221 = vrot.slane %v1166, 6
    %v1223 = vadd.f32 %v944, %v1221
    %v1224 = vxor.u32 %v1223, 2147483648
    %v1225 = vmul.f32 %v1224, 1.442695
    %v1226 = vpow.pop %v1225
    %v1227 = vadd.f32 %v1226, 1.0
    %v1228 = vrcp.pop %v1227
    %v1229 = vmul.f32 1.0, %v1228
    %v1231 = vrot.slane %v1205, 6
    %v1233 = vmul.f32 %v1219, %v1231
    %v1234 = vadd.f32 %v983, %v1233
    %v1235 = vtanh.pop %v1234
    %v1236 = vsub.f32 1.0, %v1229
    %v1237 = vmul.f32 %v1236, %v1235
    %v1239 = vrot.slane %v1123, 7
    %v1241 = vmul.f32 %v1229, %v1239
    %v1242 = vadd.f32 %v1237, %v1241
    %v1243 = vpack.c.bf16 %v1242, %v1242
    %v1245 = vrot.slane %v1243, 1
    %1247 = vmatprep.subr.bf16.mxu0 %v600
    %1248 = vmatpush1.bf16.msra.mxu0 %v599
    %1249 = vmatprep.subr.bf16.mxu0 %v603
    %1250 = vmatpush1.bf16.msra.mxu0 %v602
    %1251 = vmatprep.subr.bf16.mxu0 %v606
    %1252 = vmatpush1.bf16.msra.mxu0 %v605
    %1253 = vmatprep.subr.bf16.mxu0 %v609
    %1254 = vmatpush1.bf16.msra.mxu0 %v608
    %1255 = vmatprep.subr.bf16.mxu0 %v612
    %1256 = vmatpush1.bf16.msra.mxu0 %v611
    %1257 = vmatprep.subr.bf16.mxu0 %v615
    %1258 = vmatpush1.bf16.msra.mxu0 %v614
    %1259 = vmatprep.subr.bf16.mxu0 %v618
    %1260 = vmatpush1.bf16.msra.mxu0 %v617
    %1261 = vmatprep.subr.bf16.mxu0 %v621
    %1262 = vmatpush1.bf16.msra.mxu0 %v620
    %1263 = vmatprep.subr.bf16.mxu0 0
    %1264 = vmatpush1.bf16.msra.mxu0 0
    %1265 = vmatprep.subr.bf16.mxu0 0
    %1266 = vmatpush1.bf16.msra.mxu0 0
    %1267 = vmatprep.subr.bf16.mxu0 0
    %1268 = vmatpush1.bf16.msra.mxu0 0
    %1269 = vmatprep.subr.bf16.mxu0 0
    %1270 = vmatpush1.bf16.msra.mxu0 0
    %1271 = vmatprep.subr.bf16.mxu0 0
    %1272 = vmatpush1.bf16.msra.mxu0 0
    %1273 = vmatprep.subr.bf16.mxu0 0
    %1274 = vmatpush1.bf16.msra.mxu0 0
    %1275 = vmatprep.subr.bf16.mxu0 0
    %1276 = vmatpush1.bf16.msra.mxu0 0
    %1277 = vmatprep.subr.bf16.mxu0 0
    %1278 = vmatpush1.bf16.msra.mxu0 0
    %1279 = vmatprep.mubr.bf16.mxu0 0
    %1280 = vmatmul.mubr.bf16.gmra.mrb[0].mxu0 %v1245
    %v1281 = vpop.f32.mrb[0].mxu0
    %v1282 = vadd.f32 %v651, %v1281
    %v1283 = vpop.f32.mrb[0].mxu0
    %v1284 = vadd.f32 %v655, %v1283
    %v1285 = vpop.f32.mrb[0].mxu0
    %v1286 = vpop.f32.mrb[0].mxu0
    %1287 = vdwg.mxu0
    %1288 = vmatprep.subr.bf16.mxu0 0
    %1289 = vmatpush1.bf16.msra.mxu0 %v601
    %1290 = vmatprep.subr.bf16.mxu0 0
    %1291 = vmatpush1.bf16.msra.mxu0 %v604
    %1292 = vmatprep.subr.bf16.mxu0 0
    %1293 = vmatpush1.bf16.msra.mxu0 %v607
    %1294 = vmatprep.subr.bf16.mxu0 0
    %1295 = vmatpush1.bf16.msra.mxu0 %v610
    %1296 = vmatprep.subr.bf16.mxu0 0
    %1297 = vmatpush1.bf16.msra.mxu0 %v613
    %1298 = vmatprep.subr.bf16.mxu0 0
    %1299 = vmatpush1.bf16.msra.mxu0 %v616
    %1300 = vmatprep.subr.bf16.mxu0 0
    %1301 = vmatpush1.bf16.msra.mxu0 %v619
    %1302 = vmatprep.subr.bf16.mxu0 0
    %1303 = vmatpush1.bf16.msra.mxu0 %v622
    %1304 = vmatprep.subr.bf16.mxu0 0
    %1305 = vmatpush1.bf16.msra.mxu0 0
    %1306 = vmatprep.subr.bf16.mxu0 0
    %1307 = vmatpush1.bf16.msra.mxu0 0
    %1308 = vmatprep.subr.bf16.mxu0 0
    %1309 = vmatpush1.bf16.msra.mxu0 0
    %1310 = vmatprep.subr.bf16.mxu0 0
    %1311 = vmatpush1.bf16.msra.mxu0 0
    %1312 = vmatprep.subr.bf16.mxu0 0
    %1313 = vmatpush1.bf16.msra.mxu0 0
    %1314 = vmatprep.subr.bf16.mxu0 0
    %1315 = vmatpush1.bf16.msra.mxu0 0
    %1316 = vmatprep.subr.bf16.mxu0 0
    %1317 = vmatpush1.bf16.msra.mxu0 0
    %1318 = vmatprep.subr.bf16.mxu0 0
    %1319 = vmatpush1.bf16.msra.mxu0 0
    %1320 = vmatprep.mubr.bf16.mxu0 0
    %1321 = vmatmul.mubr.bf16.gmra.mrb[0].mxu0 %v1245
    %v1322 = vpop.f32.mrb[0].mxu0
    %v1323 = vadd.f32 %v659, %v1322
    %v1324 = vpop.f32.mrb[0].mxu0
    %v1325 = vpop.f32.mrb[0].mxu0
    %v1326 = vpop.f32.mrb[0].mxu0
    %1327 = vdwg.mxu0
    %v1329 = vrot.slane %v1282, 5
    %v1331 = vadd.f32 %v942, %v1329
    %v1332 = vxor.u32 %v1331, 2147483648
    %v1333 = vmul.f32 %v1332, 1.442695
    %v1334 = vpow.pop %v1333
    %v1335 = vadd.f32 %v1334, 1.0
    %v1336 = vrcp.pop %v1335
    %v1337 = vmul.f32 1.0, %v1336
    %v1339 = vrot.slane %v1284, 5
    %v1341 = vadd.f32 %v944, %v1339
    %v1342 = vxor.u32 %v1341, 2147483648
    %v1343 = vmul.f32 %v1342, 1.442695
    %v1344 = vpow.pop %v1343
    %v1345 = vadd.f32 %v1344, 1.0
    %v1346 = vrcp.pop %v1345
    %v1347 = vmul.f32 1.0, %v1346
    %v1349 = vrot.slane %v1323, 5
    %v1351 = vmul.f32 %v1337, %v1349
    %v1352 = vadd.f32 %v983, %v1351
    %v1353 = vtanh.pop %v1352
    %v1354 = vsub.f32 1.0, %v1347
    %v1355 = vmul.f32 %v1354, %v1353
    %v1357 = vrot.slane %v1242, 7
    %v1359 = vmul.f32 %v1347, %v1357
    %v1360 = vadd.f32 %v1355, %v1359
    %v1361 = vpack.c.bf16 %v1360, %v1360
    %v1363 = vshrl.u32 %v1361, 16
    %v1365 = vrot.slane %v1363, 1
    %1367 = vmatprep.subr.bf16.mxu0 %v600
    %1368 = vmatpush1.bf16.msra.mxu0 %v599
    %1369 = vmatprep.subr.bf16.mxu0 %v603
    %1370 = vmatpush1.bf16.msra.mxu0 %v602
    %1371 = vmatprep.subr.bf16.mxu0 %v606
    %1372 = vmatpush1.bf16.msra.mxu0 %v605
    %1373 = vmatprep.subr.bf16.mxu0 %v609
    %1374 = vmatpush1.bf16.msra.mxu0 %v608
    %1375 = vmatprep.subr.bf16.mxu0 %v612
    %1376 = vmatpush1.bf16.msra.mxu0 %v611
    %1377 = vmatprep.subr.bf16.mxu0 %v615
    %1378 = vmatpush1.bf16.msra.mxu0 %v614
    %1379 = vmatprep.subr.bf16.mxu0 %v618
    %1380 = vmatpush1.bf16.msra.mxu0 %v617
    %1381 = vmatprep.subr.bf16.mxu0 %v621
    %1382 = vmatpush1.bf16.msra.mxu0 %v620
    %1383 = vmatprep.subr.bf16.mxu0 0
    %1384 = vmatpush1.bf16.msra.mxu0 0
    %1385 = vmatprep.subr.bf16.mxu0 0
    %1386 = vmatpush1.bf16.msra.mxu0 0
    %1387 = vmatprep.subr.bf16.mxu0 0
    %1388 = vmatpush1.bf16.msra.mxu0 0
    %1389 = vmatprep.subr.bf16.mxu0 0
    %1390 = vmatpush1.bf16.msra.mxu0 0
    %1391 = vmatprep.subr.bf16.mxu0 0
    %1392 = vmatpush1.bf16.msra.mxu0 0
    %1393 = vmatprep.subr.bf16.mxu0 0
    %1394 = vmatpush1.bf16.msra.mxu0 0
    %1395 = vmatprep.subr.bf16.mxu0 0
    %1396 = vmatpush1.bf16.msra.mxu0 0
    %1397 = vmatprep.subr.bf16.mxu0 0
    %1398 = vmatpush1.bf16.msra.mxu0 0
    %1399 = vmatprep.mubr.bf16.mxu0 0
    %1400 = vmatmul.mubr.bf16.gmra.mrb[0].mxu0 %v1365
    %v1401 = vpop.f32.mrb[0].mxu0
    %v1402 = vadd.f32 %v651, %v1401
    %v1403 = vpop.f32.mrb[0].mxu0
    %v1404 = vadd.f32 %v655, %v1403
    %v1405 = vpop.f32.mrb[0].mxu0
    %v1406 = vpop.f32.mrb[0].mxu0
    %1407 = vdwg.mxu0
    %1408 = vmatprep.subr.bf16.mxu0 0
    %1409 = vmatpush1.bf16.msra.mxu0 %v601
    %1410 = vmatprep.subr.bf16.mxu0 0
    %1411 = vmatpush1.bf16.msra.mxu0 %v604
    %1412 = vmatprep.subr.bf16.mxu0 0
    %1413 = vmatpush1.bf16.msra.mxu0 %v607
    %1414 = vmatprep.subr.bf16.mxu0 0
    %1415 = vmatpush1.bf16.msra.mxu0 %v610
    %1416 = vmatprep.subr.bf16.mxu0 0
    %1417 = vmatpush1.bf16.msra.mxu0 %v613
    %1418 = vmatprep.subr.bf16.mxu0 0
    %1419 = vmatpush1.bf16.msra.mxu0 %v616
    %1420 = vmatprep.subr.bf16.mxu0 0
    %1421 = vmatpush1.bf16.msra.mxu0 %v619
    %1422 = vmatprep.subr.bf16.mxu0 0
    %1423 = vmatpush1.bf16.msra.mxu0 %v622
    %1424 = vmatprep.subr.bf16.mxu0 0
    %1425 = vmatpush1.bf16.msra.mxu0 0
    %1426 = vmatprep.subr.bf16.mxu0 0
    %1427 = vmatpush1.bf16.msra.mxu0 0
    %1428 = vmatprep.subr.bf16.mxu0 0
    %1429 = vmatpush1.bf16.msra.mxu0 0
    %1430 = vmatprep.subr.bf16.mxu0 0
    %1431 = vmatpush1.bf16.msra.mxu0 0
    %1432 = vmatprep.subr.bf16.mxu0 0
    %1433 = vmatpush1.bf16.msra.mxu0 0
    %1434 = vmatprep.subr.bf16.mxu0 0
    %1435 = vmatpush1.bf16.msra.mxu0 0
    %1436 = vmatprep.subr.bf16.mxu0 0
    %1437 = vmatpush1.bf16.msra.mxu0 0
    %1438 = vmatprep.subr.bf16.mxu0 0
    %1439 = vmatpush1.bf16.msra.mxu0 0
    %1440 = vmatprep.mubr.bf16.mxu0 0
    %1441 = vmatmul.mubr.bf16.gmra.mrb[0].mxu0 %v1365
    %v1442 = vpop.f32.mrb[0].mxu0
    %v1443 = vadd.f32 %v659, %v1442
    %v1444 = vpop.f32.mrb[0].mxu0
    %v1445 = vpop.f32.mrb[0].mxu0
    %v1446 = vpop.f32.mrb[0].mxu0
    %1447 = vdwg.mxu0
    %v1449 = vrot.slane %v1402, 4
    %v1451 = vadd.f32 %v942, %v1449
    %v1452 = vxor.u32 %v1451, 2147483648
    %v1453 = vmul.f32 %v1452, 1.442695
    %v1454 = vpow.pop %v1453
    %v1455 = vadd.f32 %v1454, 1.0
    %v1456 = vrcp.pop %v1455
    %v1457 = vmul.f32 1.0, %v1456
    %v1459 = vrot.slane %v1404, 4
    %v1461 = vadd.f32 %v944, %v1459
    %v1462 = vxor.u32 %v1461, 2147483648
    %v1463 = vmul.f32 %v1462, 1.442695
    %v1464 = vpow.pop %v1463
    %v1465 = vadd.f32 %v1464, 1.0
    %v1466 = vrcp.pop %v1465
    %v1467 = vmul.f32 1.0, %v1466
    %v1469 = vrot.slane %v1443, 4
    %v1471 = vmul.f32 %v1457, %v1469
    %v1472 = vadd.f32 %v983, %v1471
    %v1473 = vtanh.pop %v1472
    %v1474 = vsub.f32 1.0, %v1467
    %v1475 = vmul.f32 %v1474, %v1473
    %v1477 = vrot.slane %v1360, 7
    %v1479 = vmul.f32 %v1467, %v1477
    %v1480 = vadd.f32 %v1475, %v1479
    %v1481 = vpack.c.bf16 %v1480, %v1480
    %v1483 = vrot.slane %v1481, 2
    %1485 = vmatprep.subr.bf16.mxu0 %v600
    %1486 = vmatpush1.bf16.msra.mxu0 %v599
    %1487 = vmatprep.subr.bf16.mxu0 %v603
    %1488 = vmatpush1.bf16.msra.mxu0 %v602
    %1489 = vmatprep.subr.bf16.mxu0 %v606
    %1490 = vmatpush1.bf16.msra.mxu0 %v605
    %1491 = vmatprep.subr.bf16.mxu0 %v609
    %1492 = vmatpush1.bf16.msra.mxu0 %v608
    %1493 = vmatprep.subr.bf16.mxu0 %v612
    %1494 = vmatpush1.bf16.msra.mxu0 %v611
    %1495 = vmatprep.subr.bf16.mxu0 %v615
    %1496 = vmatpush1.bf16.msra.mxu0 %v614
    %1497 = vmatprep.subr.bf16.mxu0 %v618
    %1498 = vmatpush1.bf16.msra.mxu0 %v617
    %1499 = vmatprep.subr.bf16.mxu0 %v621
    %1500 = vmatpush1.bf16.msra.mxu0 %v620
    %1501 = vmatprep.subr.bf16.mxu0 0
    %1502 = vmatpush1.bf16.msra.mxu0 0
    %1503 = vmatprep.subr.bf16.mxu0 0
    %1504 = vmatpush1.bf16.msra.mxu0 0
    %1505 = vmatprep.subr.bf16.mxu0 0
    %1506 = vmatpush1.bf16.msra.mxu0 0
    %1507 = vmatprep.subr.bf16.mxu0 0
    %1508 = vmatpush1.bf16.msra.mxu0 0
    %1509 = vmatprep.subr.bf16.mxu0 0
    %1510 = vmatpush1.bf16.msra.mxu0 0
    %1511 = vmatprep.subr.bf16.mxu0 0
    %1512 = vmatpush1.bf16.msra.mxu0 0
    %1513 = vmatprep.subr.bf16.mxu0 0
    %1514 = vmatpush1.bf16.msra.mxu0 0
    %1515 = vmatprep.subr.bf16.mxu0 0
    %1516 = vmatpush1.bf16.msra.mxu0 0
    %1517 = vmatprep.mubr.bf16.mxu0 0
    %1518 = vmatmul.mubr.bf16.gmra.mrb[0].mxu0 %v1483
    %v1519 = vpop.f32.mrb[0].mxu0
    %v1520 = vadd.f32 %v651, %v1519
    %v1521 = vpop.f32.mrb[0].mxu0
    %v1522 = vadd.f32 %v655, %v1521
    %v1523 = vpop.f32.mrb[0].mxu0
    %v1524 = vpop.f32.mrb[0].mxu0
    %1525 = vdwg.mxu0
    %1526 = vmatprep.subr.bf16.mxu0 0
    %1527 = vmatpush1.bf16.msra.mxu0 %v601
    %1528 = vmatprep.subr.bf16.mxu0 0
    %1529 = vmatpush1.bf16.msra.mxu0 %v604
    %1530 = vmatprep.subr.bf16.mxu0 0
    %1531 = vmatpush1.bf16.msra.mxu0 %v607
    %1532 = vmatprep.subr.bf16.mxu0 0
    %1533 = vmatpush1.bf16.msra.mxu0 %v610
    %1534 = vmatprep.subr.bf16.mxu0 0
    %1535 = vmatpush1.bf16.msra.mxu0 %v613
    %1536 = vmatprep.subr.bf16.mxu0 0
    %1537 = vmatpush1.bf16.msra.mxu0 %v616
    %1538 = vmatprep.subr.bf16.mxu0 0
    %1539 = vmatpush1.bf16.msra.mxu0 %v619
    %1540 = vmatprep.subr.bf16.mxu0 0
    %1541 = vmatpush1.bf16.msra.mxu0 %v622
    %1542 = vmatprep.subr.bf16.mxu0 0
    %1543 = vmatpush1.bf16.msra.mxu0 0
    %1544 = vmatprep.subr.bf16.mxu0 0
    %1545 = vmatpush1.bf16.msra.mxu0 0
    %1546 = vmatprep.subr.bf16.mxu0 0
    %1547 = vmatpush1.bf16.msra.mxu0 0
    %1548 = vmatprep.subr.bf16.mxu0 0
    %1549 = vmatpush1.bf16.msra.mxu0 0
    %1550 = vmatprep.subr.bf16.mxu0 0
    %1551 = vmatpush1.bf16.msra.mxu0 0
    %1552 = vmatprep.subr.bf16.mxu0 0
    %1553 = vmatpush1.bf16.msra.mxu0 0
    %1554 = vmatprep.subr.bf16.mxu0 0
    %1555 = vmatpush1.bf16.msra.mxu0 0
    %1556 = vmatprep.subr.bf16.mxu0 0
    %1557 = vmatpush1.bf16.msra.mxu0 0
    %1558 = vmatprep.mubr.bf16.mxu0 0
    %1559 = vmatmul.mubr.bf16.gmra.mrb[0].mxu0 %v1483
    %v1560 = vpop.f32.mrb[0].mxu0
    %v1561 = vadd.f32 %v659, %v1560
    %v1562 = vpop.f32.mrb[0].mxu0
    %v1563 = vpop.f32.mrb[0].mxu0
    %v1564 = vpop.f32.mrb[0].mxu0
    %1565 = vdwg.mxu0
    %v1567 = vrot.slane %v1520, 3
    %v1569 = vadd.f32 %v942, %v1567
    %v1570 = vxor.u32 %v1569, 2147483648
    %v1571 = vmul.f32 %v1570, 1.442695
    %v1572 = vpow.pop %v1571
    %v1573 = vadd.f32 %v1572, 1.0
    %v1574 = vrcp.pop %v1573
    %v1575 = vmul.f32 1.0, %v1574
    %v1577 = vrot.slane %v1522, 3
    %v1579 = vadd.f32 %v944, %v1577
    %v1580 = vxor.u32 %v1579, 2147483648
    %v1581 = vmul.f32 %v1580, 1.442695
    %v1582 = vpow.pop %v1581
    %v1583 = vadd.f32 %v1582, 1.0
    %v1584 = vrcp.pop %v1583
    %v1585 = vmul.f32 1.0, %v1584
    %v1587 = vrot.slane %v1561, 3
    %v1589 = vmul.f32 %v1575, %v1587
    %v1590 = vadd.f32 %v983, %v1589
    %v1591 = vtanh.pop %v1590
    %v1592 = vsub.f32 1.0, %v1585
    %v1593 = vmul.f32 %v1592, %v1591
    %v1595 = vrot.slane %v1480, 7
    %v1597 = vmul.f32 %v1585, %v1595
    %v1598 = vadd.f32 %v1593, %v1597
    %v1599 = vpack.c.bf16 %v1598, %v1598
    %v1601 = vshrl.u32 %v1599, 16
    %v1603 = vrot.slane %v1601, 2
    %1605 = vmatprep.subr.bf16.mxu0 %v600
    %1606 = vmatpush1.bf16.msra.mxu0 %v599
    %1607 = vmatprep.subr.bf16.mxu0 %v603
    %1608 = vmatpush1.bf16.msra.mxu0 %v602
    %1609 = vmatprep.subr.bf16.mxu0 %v606
    %1610 = vmatpush1.bf16.msra.mxu0 %v605
    %1611 = vmatprep.subr.bf16.mxu0 %v609
    %1612 = vmatpush1.bf16.msra.mxu0 %v608
    %1613 = vmatprep.subr.bf16.mxu0 %v612
    %1614 = vmatpush1.bf16.msra.mxu0 %v611
    %1615 = vmatprep.subr.bf16.mxu0 %v615
    %1616 = vmatpush1.bf16.msra.mxu0 %v614
    %1617 = vmatprep.subr.bf16.mxu0 %v618
    %1618 = vmatpush1.bf16.msra.mxu0 %v617
    %1619 = vmatprep.subr.bf16.mxu0 %v621
    %1620 = vmatpush1.bf16.msra.mxu0 %v620
    %1621 = vmatprep.subr.bf16.mxu0 0
    %1622 = vmatpush1.bf16.msra.mxu0 0
    %1623 = vmatprep.subr.bf16.mxu0 0
    %1624 = vmatpush1.bf16.msra.mxu0 0
    %1625 = vmatprep.subr.bf16.mxu0 0
    %1626 = vmatpush1.bf16.msra.mxu0 0
    %1627 = vmatprep.subr.bf16.mxu0 0
    %1628 = vmatpush1.bf16.msra.mxu0 0
    %1629 = vmatprep.subr.bf16.mxu0 0
    %1630 = vmatpush1.bf16.msra.mxu0 0
    %1631 = vmatprep.subr.bf16.mxu0 0
    %1632 = vmatpush1.bf16.msra.mxu0 0
    %1633 = vmatprep.subr.bf16.mxu0 0
    %1634 = vmatpush1.bf16.msra.mxu0 0
    %1635 = vmatprep.subr.bf16.mxu0 0
    %1636 = vmatpush1.bf16.msra.mxu0 0
    %1637 = vmatprep.mubr.bf16.mxu0 0
    %1638 = vmatmul.mubr.bf16.gmra.mrb[0].mxu0 %v1603
    %v1639 = vpop.f32.mrb[0].mxu0
    %v1640 = vadd.f32 %v651, %v1639
    %v1641 = vpop.f32.mrb[0].mxu0
    %v1642 = vadd.f32 %v655, %v1641
    %v1643 = vpop.f32.mrb[0].mxu0
    %v1644 = vpop.f32.mrb[0].mxu0
    %1645 = vdwg.mxu0
    %1646 = vmatprep.subr.bf16.mxu0 0
    %1647 = vmatpush1.bf16.msra.mxu0 %v601
    %1648 = vmatprep.subr.bf16.mxu0 0
    %1649 = vmatpush1.bf16.msra.mxu0 %v604
    %1650 = vmatprep.subr.bf16.mxu0 0
    %1651 = vmatpush1.bf16.msra.mxu0 %v607
    %1652 = vmatprep.subr.bf16.mxu0 0
    %1653 = vmatpush1.bf16.msra.mxu0 %v610
    %1654 = vmatprep.subr.bf16.mxu0 0
    %1655 = vmatpush1.bf16.msra.mxu0 %v613
    %1656 = vmatprep.subr.bf16.mxu0 0
    %1657 = vmatpush1.bf16.msra.mxu0 %v616
    %1658 = vmatprep.subr.bf16.mxu0 0
    %1659 = vmatpush1.bf16.msra.mxu0 %v619
    %1660 = vmatprep.subr.bf16.mxu0 0
    %1661 = vmatpush1.bf16.msra.mxu0 %v622
    %1662 = vmatprep.subr.bf16.mxu0 0
    %1663 = vmatpush1.bf16.msra.mxu0 0
    %1664 = vmatprep.subr.bf16.mxu0 0
    %1665 = vmatpush1.bf16.msra.mxu0 0
    %1666 = vmatprep.subr.bf16.mxu0 0
    %1667 = vmatpush1.bf16.msra.mxu0 0
    %1668 = vmatprep.subr.bf16.mxu0 0
    %1669 = vmatpush1.bf16.msra.mxu0 0
    %1670 = vmatprep.subr.bf16.mxu0 0
    %1671 = vmatpush1.bf16.msra.mxu0 0
    %1672 = vmatprep.subr.bf16.mxu0 0
    %1673 = vmatpush1.bf16.msra.mxu0 0
    %1674 = vmatprep.subr.bf16.mxu0 0
    %1675 = vmatpush1.bf16.msra.mxu0 0
    %1676 = vmatprep.subr.bf16.mxu0 0
    %1677 = vmatpush1.bf16.msra.mxu0 0
    %1678 = vmatprep.mubr.bf16.mxu0 0
    %1679 = vmatmul.mubr.bf16.gmra.mrb[0].mxu0 %v1603
    %v1680 = vpop.f32.mrb[0].mxu0
    %v1681 = vadd.f32 %v659, %v1680
    %v1682 = vpop.f32.mrb[0].mxu0
    %v1683 = vpop.f32.mrb[0].mxu0
    %v1684 = vpop.f32.mrb[0].mxu0
    %1685 = vdwg.mxu0
    %v1687 = vrot.slane %v1640, 2
    %v1689 = vadd.f32 %v942, %v1687
    %v1690 = vxor.u32 %v1689, 2147483648
    %v1691 = vmul.f32 %v1690, 1.442695
    %v1692 = vpow.pop %v1691
    %v1693 = vadd.f32 %v1692, 1.0
    %v1694 = vrcp.pop %v1693
    %v1695 = vmul.f32 1.0, %v1694
    %v1697 = vrot.slane %v1642, 2
    %v1699 = vadd.f32 %v944, %v1697
    %v1700 = vxor.u32 %v1699, 2147483648
    %v1701 = vmul.f32 %v1700, 1.442695
    %v1702 = vpow.pop %v1701
    %v1703 = vadd.f32 %v1702, 1.0
    %v1704 = vrcp.pop %v1703
    %v1705 = vmul.f32 1.0, %v1704
    %v1707 = vrot.slane %v1681, 2
    %v1709 = vmul.f32 %v1695, %v1707
    %v1710 = vadd.f32 %v983, %v1709
    %v1711 = vtanh.pop %v1710
    %v1712 = vsub.f32 1.0, %v1705
    %v1713 = vmul.f32 %v1712, %v1711
    %v1715 = vrot.slane %v1598, 7
    %v1717 = vmul.f32 %v1705, %v1715
    %v1718 = vadd.f32 %v1713, %v1717
    %v1719 = vpack.c.bf16 %v1718, %v1718
    %v1721 = vrot.slane %v1719, 3
    %1723 = vmatprep.subr.bf16.mxu0 %v600
    %1724 = vmatpush1.bf16.msra.mxu0 %v599
    %1725 = vmatprep.subr.bf16.mxu0 %v603
    %1726 = vmatpush1.bf16.msra.mxu0 %v602
    %1727 = vmatprep.subr.bf16.mxu0 %v606
    %1728 = vmatpush1.bf16.msra.mxu0 %v605
    %1729 = vmatprep.subr.bf16.mxu0 %v609
    %1730 = vmatpush1.bf16.msra.mxu0 %v608
    %1731 = vmatprep.subr.bf16.mxu0 %v612
    %1732 = vmatpush1.bf16.msra.mxu0 %v611
    %1733 = vmatprep.subr.bf16.mxu0 %v615
    %1734 = vmatpush1.bf16.msra.mxu0 %v614
    %1735 = vmatprep.subr.bf16.mxu0 %v618
    %1736 = vmatpush1.bf16.msra.mxu0 %v617
    %1737 = vmatprep.subr.bf16.mxu0 %v621
    %1738 = vmatpush1.bf16.msra.mxu0 %v620
    %1739 = vmatprep.subr.bf16.mxu0 0
    %1740 = vmatpush1.bf16.msra.mxu0 0
    %1741 = vmatprep.subr.bf16.mxu0 0
    %1742 = vmatpush1.bf16.msra.mxu0 0
    %1743 = vmatprep.subr.bf16.mxu0 0
    %1744 = vmatpush1.bf16.msra.mxu0 0
    %1745 = vmatprep.subr.bf16.mxu0 0
    %1746 = vmatpush1.bf16.msra.mxu0 0
    %1747 = vmatprep.subr.bf16.mxu0 0
    %1748 = vmatpush1.bf16.msra.mxu0 0
    %1749 = vmatprep.subr.bf16.mxu0 0
    %1750 = vmatpush1.bf16.msra.mxu0 0
    %1751 = vmatprep.subr.bf16.mxu0 0
    %1752 = vmatpush1.bf16.msra.mxu0 0
    %1753 = vmatprep.subr.bf16.mxu0 0
    %1754 = vmatpush1.bf16.msra.mxu0 0
    %1755 = vmatprep.mubr.bf16.mxu0 0
    %1756 = vmatmul.mubr.bf16.gmra.mrb[0].mxu0 %v1721
    %v1757 = vpop.f32.mrb[0].mxu0
    %v1758 = vadd.f32 %v651, %v1757
    %v1759 = vpop.f32.mrb[0].mxu0
    %v1760 = vadd.f32 %v655, %v1759
    %v1761 = vpop.f32.mrb[0].mxu0
    %v1762 = vpop.f32.mrb[0].mxu0
    %1763 = vdwg.mxu0
    %1764 = vmatprep.subr.bf16.mxu0 0
    %1765 = vmatpush1.bf16.msra.mxu0 %v601
    %1766 = vmatprep.subr.bf16.mxu0 0
    %1767 = vmatpush1.bf16.msra.mxu0 %v604
    %1768 = vmatprep.subr.bf16.mxu0 0
    %1769 = vmatpush1.bf16.msra.mxu0 %v607
    %1770 = vmatprep.subr.bf16.mxu0 0
    %1771 = vmatpush1.bf16.msra.mxu0 %v610
    %1772 = vmatprep.subr.bf16.mxu0 0
    %1773 = vmatpush1.bf16.msra.mxu0 %v613
    %1774 = vmatprep.subr.bf16.mxu0 0
    %1775 = vmatpush1.bf16.msra.mxu0 %v616
    %1776 = vmatprep.subr.bf16.mxu0 0
    %1777 = vmatpush1.bf16.msra.mxu0 %v619
    %1778 = vmatprep.subr.bf16.mxu0 0
    %1779 = vmatpush1.bf16.msra.mxu0 %v622
    %1780 = vmatprep.subr.bf16.mxu0 0
    %1781 = vmatpush1.bf16.msra.mxu0 0
    %1782 = vmatprep.subr.bf16.mxu0 0
    %1783 = vmatpush1.bf16.msra.mxu0 0
    %1784 = vmatprep.subr.bf16.mxu0 0
    %1785 = vmatpush1.bf16.msra.mxu0 0
    %1786 = vmatprep.subr.bf16.mxu0 0
    %1787 = vmatpush1.bf16.msra.mxu0 0
    %1788 = vmatprep.subr.bf16.mxu0 0
    %1789 = vmatpush1.bf16.msra.mxu0 0
    %1790 = vmatprep.subr.bf16.mxu0 0
    %1791 = vmatpush1.bf16.msra.mxu0 0
    %1792 = vmatprep.subr.bf16.mxu0 0
    %1793 = vmatpush1.bf16.msra.mxu0 0
    %1794 = vmatprep.subr.bf16.mxu0 0
    %1795 = vmatpush1.bf16.msra.mxu0 0
    %1796 = vmatprep.mubr.bf16.mxu0 0
    %1797 = vmatmul.mubr.bf16.gmra.mrb[0].mxu0 %v1721
    %v1798 = vpop.f32.mrb[0].mxu0
    %v1799 = vadd.f32 %v659, %v1798
    %v1800 = vpop.f32.mrb[0].mxu0
    %v1801 = vpop.f32.mrb[0].mxu0
    %v1802 = vpop.f32.mrb[0].mxu0
    %1803 = vdwg.mxu0
    %v1805 = vrot.slane %v1758, 1
    %v1807 = vadd.f32 %v942, %v1805
    %v1808 = vxor.u32 %v1807, 2147483648
    %v1809 = vmul.f32 %v1808, 1.442695
    %v1810 = vpow.pop %v1809
    %v1811 = vadd.f32 %v1810, 1.0
    %v1812 = vrcp.pop %v1811
    %v1813 = vmul.f32 1.0, %v1812
    %v1815 = vrot.slane %v1760, 1
    %v1817 = vadd.f32 %v944, %v1815
    %v1818 = vxor.u32 %v1817, 2147483648
    %v1819 = vmul.f32 %v1818, 1.442695
    %v1820 = vpow.pop %v1819
    %v1821 = vadd.f32 %v1820, 1.0
    %v1822 = vrcp.pop %v1821
    %v1823 = vmul.f32 1.0, %v1822
    %v1825 = vrot.slane %v1799, 1
    %v1827 = vmul.f32 %v1813, %v1825
    %v1828 = vadd.f32 %v983, %v1827
    %v1829 = vtanh.pop %v1828
    %v1830 = vsub.f32 1.0, %v1823
    %v1831 = vmul.f32 %v1830, %v1829
    %v1833 = vrot.slane %v1718, 7
    %v1835 = vmul.f32 %v1823, %v1833
    %v1836 = vadd.f32 %v1831, %v1835
    %vm1837 = vcmask 1040384
    %v1838 = vsel %vm1837, %v1008, %v1123
    %vm1839 = vcmask 1041408
    %v1840 = vsel %vm1839, %v1838, %v1242
    %vm1841 = vcmask 1042432
    %v1842 = vsel %vm1841, %v1840, %v1360
    %vm1843 = vcmask 1043456
    %v1844 = vsel %vm1843, %v1842, %v1480
    %vm1845 = vcmask 1044480
    %v1846 = vsel %vm1845, %v1844, %v1598
    %vm1847 = vcmask 1045504
    %v1848 = vsel %vm1847, %v1846, %v1718
    %vm1849 = vcmask 1046528
    %v1850 = vsel %vm1849, %v1848, %v1836
    %1851 = vst [vmem:[#allocation11] sm:$0xff] %v1850
    %1852 = vst [vmem:[%s8 - $0x7] sm:$0x80] %v1836
    // Predicated region
    $region278: #{encoder_rnn_forward.1} parent=1 // pred_check
      _
    $region279: #{encoder_rnn_forward.1} parent=1 // pred_check_branch
      %1854 = sbr.rel (0) target = $region281
    $region280: #{encoder_rnn_forward.1} parent=1 // pred_region
      %s1856 = ssub.s32 128, 128
      %1857 = vsyncadd [#allocation6], %s1856
      %s1859 = sshll.u32 [#allocation11], 4
      %s1860 = int_to_ptr.vmem [resolvable:$true] %s1859
      %1862 = dma.vmem_to_hbm [thread:$0]  %s1860, 128, %s7, [#allocation6]
    $region281: #{encoder_rnn_forward.1} parent=1 // pred_fallthru
      _
    // Predicated region
    $region282: #{encoder_rnn_forward.1} parent=1 // pred_check
      _
    $region283: #{encoder_rnn_forward.1} parent=1 // pred_check_branch
      %1864 = sbr.rel (0) target = $region285
    $region284: #{encoder_rnn_forward.1} parent=1 // pred_region
      _
    $region285: #{encoder_rnn_forward.1} parent=1 // pred_fallthru
      _
    // Predicated region
    $region286: #{encoder_rnn_forward.1} parent=1 // pred_check
      _
    $region287: #{encoder_rnn_forward.1} parent=1 // pred_check_branch
      %1866 = sbr.rel (0) target = $region289
    $region288: #{encoder_rnn_forward.1} parent=1 // pred_region
      %1867 = dma.done [#allocation6], 128
    $region289: #{encoder_rnn_forward.1} parent=1 // pred_fallthru
      _
    // Predicated region
    $region290: #{encoder_rnn_forward.1} parent=1 // pred_check
      _
    $region291: #{encoder_rnn_forward.1} parent=1 // pred_check_branch
      %1869 = sbr.rel (0) target = $region293
    $region292: #{encoder_rnn_forward.1} parent=1 // pred_region
      _
    $region293: #{encoder_rnn_forward.1} parent=1 // pred_fallthru
      _
    %1870 = vsyncpa [#allocation5], 1
    %1871 = vsyncpa [#allocation10], 1
    %1872 = vsyncpa [#allocation6], 1
    %1873 = vsyncpa [#allocation7], 1
  %1874 = vsyncmov [#allocation3]
  %s1875 = vpop.sfrf %1874
  %p1876 = scmp.eq.s32.totalorder %s1875, 0
  %p1877 = pneg %p1876
  %1879 = shalt.err (%p1877)
  %s1880 = scalar_lea.sflag [#allocation3], 1
  %1881 = vsyncmov %s1880
  %s1882 = vpop.sfrf %1881
  %p1883 = scmp.eq.s32.totalorder %s1882, 0
  %p1884 = pneg %p1883
  %1886 = shalt.err (%p1884)
  %s1887 = scalar_lea.sflag [#allocation3], 2
  %1888 = vsyncmov %s1887
  %s1889 = vpop.sfrf %1888
  %p1890 = scmp.eq.s32.totalorder %s1889, 0
  %p1891 = pneg %p1890
  %1893 = shalt.err (%p1891)
  %s1894 = scalar_lea.sflag [#allocation3], 3
  %1895 = vsyncmov %s1894
  %s1896 = vpop.sfrf %1895
  %p1897 = scmp.eq.s32.totalorder %s1896, 0
  %p1898 = pneg %p1897
  %1900 = shalt.err (%p1898)
  %s1901 = scalar_lea.sflag [#allocation3], 4
  %1902 = vsyncmov %s1901
  %s1903 = vpop.sfrf %1902
  %p1904 = scmp.eq.s32.totalorder %s1903, 0
  %p1905 = pneg %p1904
  %1907 = shalt.err (%p1905)
  %s1908 = scalar_lea.sflag [#allocation3], 5
  %1909 = vsyncmov %s1908
  %s1910 = vpop.sfrf %1909
  %p1911 = scmp.eq.s32.totalorder %s1910, 0
  %p1912 = pneg %p1911
  %1914 = shalt.err (%p1912)
  %s1915 = scalar_lea.sflag [#allocation3], 6
  %1916 = vsyncmov %s1915
  %s1917 = vpop.sfrf %1916
  %p1918 = scmp.eq.s32.totalorder %s1917, 0
  %p1919 = pneg %p1918
  %1921 = shalt.err (%p1919)
  %s1922 = scalar_lea.sflag [#allocation3], 7
  %1923 = vsyncmov %s1922
  %s1924 = vpop.sfrf %1923
  %p1925 = scmp.eq.s32.totalorder %s1924, 0
  %p1926 = pneg %p1925
  %1928 = shalt.err (%p1926)

</llo_original>
